<compile_context>
chip_gen: v6e
topology: v6e:2x2x1
jax: 0.10.0
libtpu: 0.0.40
codegen_flags: <defaults>
</compile_context>

<pallas_src>
import functools

import jax
import jax.numpy as jnp
from jax.experimental import pallas as pl
from jax.experimental.pallas import tpu as pltpu

BN_EPS = 1e-5


# ----------------------------------------------------------------------------
# Pallas kernels
# ----------------------------------------------------------------------------
def _bn_relu_kernel(x_ref, scale_ref, shift_ref, o_ref):
    x = x_ref[...].astype(jnp.float32)
    y = x * scale_ref[...] + shift_ref[...]
    o_ref[...] = jnp.maximum(y, 0.0).astype(o_ref.dtype)


def _matmul_bn_relu_kernel(a_ref, b_ref, scale_ref, shift_ref, relu_ref, o_ref):
    # bf16 operands -> MXU, f32 accumulation; per-output-column affine
    # (folded BN) + selective ReLU epilogue while the tile is still in vregs.
    acc = jnp.dot(a_ref[...], b_ref[...], preferred_element_type=jnp.float32)
    y = acc * scale_ref[...] + shift_ref[...]
    y = jnp.where(relu_ref[...] > 0.0, jnp.maximum(y, 0.0), y)
    o_ref[...] = y.astype(o_ref.dtype)


def _matmul_residual_kernel(a_ref, b_ref, r_ref, o_ref):
    acc = jnp.dot(a_ref[...], b_ref[...], preferred_element_type=jnp.float32)
    o_ref[...] = (acc + r_ref[...].astype(jnp.float32)).astype(o_ref.dtype)


def _matmul_residual_bn_relu_kernel(a_ref, b_ref, r_ref, scale_ref, shift_ref,
                                    o_ref, act_ref):
    # conv2 matmul + residual add, plus the NEXT block's bn1+ReLU computed on
    # the f32 result while it is still in vregs (second output, bf16).
    acc = jnp.dot(a_ref[...], b_ref[...], preferred_element_type=jnp.float32)
    out = acc + r_ref[...].astype(jnp.float32)
    o_ref[...] = out.astype(o_ref.dtype)
    act = out * scale_ref[...] + shift_ref[...]
    act_ref[...] = jnp.maximum(act, 0.0).astype(act_ref.dtype)


# ----------------------------------------------------------------------------
# Tiling helpers
# ----------------------------------------------------------------------------
def _pick_tile(m, tm_max=512, min_steps=2):
    """Row tile that divides M exactly (no pad/slice copies); prefer >=2 grid
    steps so megacore (v7x: 2 TCs) can shard the 'parallel' axis."""
    cands = [t for t in (1024, 512, 256, 128, 64, 32, 16, 8) if t <= tm_max]
    for t in cands:
        if m % t == 0 and m // t >= min_steps:
            return t
    for t in cands:
        if m % t == 0:
            return t
    return m  # ragged/tiny M: single full-extent block


def _matmul_row_tile(M, K, N, budget_bytes=10 << 20):
    """Row tile so the resident (double-buffered) weight block plus the
    double-buffered A / out / act / residual row tiles stay well under the
    default scoped-VMEM limit (16 MiB v5e, 32 MiB v6e/v7x)."""
    per_row = 2 * (2 * K + 10 * N)      # bf16 A + f32 out + bf16 act + residual
    weight = 2 * (2 * K * N)            # double-buffered bf16 weights
    avail = max(budget_bytes - weight, per_row * 8)
    return _pick_tile(M, max(8, min(512, avail // per_row)))


# ----------------------------------------------------------------------------
# Pallas-call wrappers
# ----------------------------------------------------------------------------
def bn_relu_nhwc(x, scale, shift, *, out_dtype=jnp.bfloat16):
    """y = relu(x * scale + shift), per-channel scale/shift.  x: (N,H,W,C).

    Runs on a lane-dense (N*H, W*C) view (scale/shift tiled W times) so the
    output stores are unmasked full-lane `vst`s even when C < 128.
    """
    N, H, W, C = x.shape
    L = W * C
    M = N * H
    x2 = x.reshape(M, L)
    scale_t = jnp.tile(scale.astype(jnp.float32), W).reshape(1, L)
    shift_t = jnp.tile(shift.astype(jnp.float32), W).reshape(1, L)
    tm_max = max(8, min(512, (4 << 20) // (10 * L)))
    tm = _pick_tile(M, tm_max)
    y = pl.pallas_call(
        _bn_relu_kernel,
        out_shape=jax.ShapeDtypeStruct((M, L), out_dtype),
        grid=(M // tm,),
        in_specs=[
            pl.BlockSpec((tm, L), lambda i: (i, 0)),
            pl.BlockSpec((1, L), lambda i: (0, 0)),
            pl.BlockSpec((1, L), lambda i: (0, 0)),
        ],
        out_specs=pl.BlockSpec((tm, L), lambda i: (i, 0)),
        compiler_params=pltpu.CompilerParams(
            dimension_semantics=("parallel",)),
    )(x2, scale_t, shift_t)
    return y.reshape(N, H, W, C)


def matmul_bn_relu(a, b, scale, shift, relu_mask, *, out_dtype=jnp.bfloat16):
    """o = epilogue(a @ b); epilogue = per-column scale/shift + masked ReLU.

    a: (M, K) bf16, b: (K, N) bf16, scale/shift/relu_mask: (N,).
    """
    M, K = a.shape
    K2, N = b.shape
    assert K == K2
    tm = _matmul_row_tile(M, K, N)
    return pl.pallas_call(
        _matmul_bn_relu_kernel,
        out_shape=jax.ShapeDtypeStruct((M, N), out_dtype),
        grid=(M // tm,),
        in_specs=[
            pl.BlockSpec((tm, K), lambda i: (i, 0)),
            pl.BlockSpec((K, N), lambda i: (0, 0)),
            pl.BlockSpec((1, N), lambda i: (0, 0)),
            pl.BlockSpec((1, N), lambda i: (0, 0)),
            pl.BlockSpec((1, N), lambda i: (0, 0)),
        ],
        out_specs=pl.BlockSpec((tm, N), lambda i: (i, 0)),
        compiler_params=pltpu.CompilerParams(
            dimension_semantics=("parallel",)),
    )(a.astype(jnp.bfloat16), b.astype(jnp.bfloat16),
      scale.reshape(1, N).astype(jnp.float32),
      shift.reshape(1, N).astype(jnp.float32),
      relu_mask.reshape(1, N).astype(jnp.float32))


def matmul_residual(a, b, residual, *, out_dtype=jnp.float32):
    """o = a @ b + residual (residual added in f32, never fabricated)."""
    M, K = a.shape
    K2, N = b.shape
    assert K == K2 and residual.shape == (M, N)
    tm = _matmul_row_tile(M, K, N)
    return pl.pallas_call(
        _matmul_residual_kernel,
        out_shape=jax.ShapeDtypeStruct((M, N), out_dtype),
        grid=(M // tm,),
        in_specs=[
            pl.BlockSpec((tm, K), lambda i: (i, 0)),
            pl.BlockSpec((K, N), lambda i: (0, 0)),
            pl.BlockSpec((tm, N), lambda i: (i, 0)),
        ],
        out_specs=pl.BlockSpec((tm, N), lambda i: (i, 0)),
        compiler_params=pltpu.CompilerParams(
            dimension_semantics=("parallel",)),
    )(a.astype(jnp.bfloat16), b.astype(jnp.bfloat16), residual)


def matmul_residual_bn_relu(a, b, residual, scale, shift, *,
                            out_dtype=jnp.float32, act_dtype=jnp.bfloat16):
    """out = a @ b + residual;  act = relu(out * scale + shift).

    Used for every block except the last: `act` is the next block's
    relu(bn1(.)) so no separate bn_relu launch / HBM re-read is needed.
    """
    M, K = a.shape
    K2, N = b.shape
    assert K == K2 and residual.shape == (M, N)
    tm = _matmul_row_tile(M, K, N)
    return pl.pallas_call(
        _matmul_residual_bn_relu_kernel,
        out_shape=(jax.ShapeDtypeStruct((M, N), out_dtype),
                   jax.ShapeDtypeStruct((M, N), act_dtype)),
        grid=(M // tm,),
        in_specs=[
            pl.BlockSpec((tm, K), lambda i: (i, 0)),
            pl.BlockSpec((K, N), lambda i: (0, 0)),
            pl.BlockSpec((tm, N), lambda i: (i, 0)),
            pl.BlockSpec((1, N), lambda i: (0, 0)),
            pl.BlockSpec((1, N), lambda i: (0, 0)),
        ],
        out_specs=[pl.BlockSpec((tm, N), lambda i: (i, 0)),
                   pl.BlockSpec((tm, N), lambda i: (i, 0))],
        compiler_params=pltpu.CompilerParams(
            dimension_semantics=("parallel",)),
    )(a.astype(jnp.bfloat16), b.astype(jnp.bfloat16), residual,
      scale.reshape(1, N).astype(jnp.float32),
      shift.reshape(1, N).astype(jnp.float32))


# ----------------------------------------------------------------------------
# Plain-JAX glue: im2col, parameter preparation, block composition
# ----------------------------------------------------------------------------
def im2col(x, kh, kw, stride, padding):
    """x: (N,H,W,C) -> (N*OH*OW, kh*kw*C) with K ordered (kh, kw, c)."""
    N, H, W, C = x.shape
    OH = (H + 2 * padding - kh) // stride + 1
    OW = (W + 2 * padding - kw) // stride + 1
    xp = jnp.pad(x, ((0, 0), (padding, padding), (padding, padding), (0, 0)))
    cols = []
    for i in range(kh):
        for j in range(kw):
            patch = xp[:, i:i + (OH - 1) * stride + 1:stride,
                          j:j + (OW - 1) * stride + 1:stride, :]
            cols.append(patch)
    cols = jnp.stack(cols, axis=3)               # (N, OH, OW, kh*kw, C)
    return cols.reshape(N * OH * OW, kh * kw * C), (N, OH, OW)


def _w_to_matrix(w):
    """PyTorch conv weight (Cout, Cin, KH, KW) -> (KH*KW*Cin, Cout)."""
    cout, cin, kh, kw = w.shape
    return jnp.transpose(w, (2, 3, 1, 0)).reshape(kh * kw * cin, cout)


def _bn_scale_shift(gamma, beta, mean, var):
    scale = gamma * jax.lax.rsqrt(var + BN_EPS)
    shift = beta - mean * scale
    return scale, shift


def prepare_block_params(p):
    """Fold BN into scale/shift and pre-transpose weights to bf16 matmul form.

    For the projection-shortcut case the 1x1 weight is packed as extra output
    columns of conv1's weight matrix (its input is the centre tap of the 3x3
    im2col), with a matching per-column scale/shift/relu-mask so the conv1
    kernel applies bn2+ReLU only to the conv1 half.
    """
    cout, cin = p["conv1_w"].shape[0], p["conv1_w"].shape[1]
    equal = (cin == cout)
    s1, b1 = _bn_scale_shift(p["bn1_gamma"], p["bn1_beta"],
                             p["bn1_mean"], p["bn1_var"])
    s2, b2 = _bn_scale_shift(p["bn2_gamma"], p["bn2_beta"],
                             p["bn2_mean"], p["bn2_var"])
    w1 = _w_to_matrix(p["conv1_w"])                       # (9*cin, cout)
    w2 = _w_to_matrix(p["conv2_w"]).astype(jnp.bfloat16)  # (9*cout, cout)
    if equal:
        w1cat = w1.astype(jnp.bfloat16)
        scale_cat, shift_cat = s2, b2
        relu_cat = jnp.ones((cout,), jnp.float32)
    else:
        ws = _w_to_matrix(p["convs_w"])                   # (cin, cout)
        ws_exp = jnp.zeros((9 * cin, cout), w1.dtype)
        ws_exp = ws_exp.at[4 * cin:5 * cin, :].set(ws)    # centre tap rows
        w1cat = jnp.concatenate([w1, ws_exp], axis=1).astype(jnp.bfloat16)
        scale_cat = jnp.concatenate([s2, jnp.ones((cout,), s2.dtype)])
        shift_cat = jnp.concatenate([b2, jnp.zeros((cout,), b2.dtype)])
        relu_cat = jnp.concatenate(
            [jnp.ones((cout,), jnp.float32), jnp.zeros((cout,), jnp.float32)])
    return {"s1": s1, "b1": b1, "w1cat": w1cat, "w2": w2,
            "scale_cat": scale_cat, "shift_cat": shift_cat,
            "relu_cat": relu_cat}


def prepare_network_block_params(params):
    return [prepare_block_params(p) for p in params]


def basic_block_forward(x, act, p, stride, next_sb=None):
    """WRN pre-activation BasicBlock.

    x:   (N,H,W,Cin) f32  block input (pre-BN), feeds the identity shortcut.
    act: (N,H,W,Cin) bf16 relu(bn1(x)), feeds conv1 (and the 1x1 projection
         shortcut packed into conv1's extra output columns when Cin != Cout).
    next_sb: optional (scale, shift) of the NEXT block's bn1; when given, the
         conv2 kernel also emits relu(bn1_next(out)) as a second output.

    Returns (out_nhwc f32, act_next_nhwc bf16 or None).
    """
    N, H, W, cin = x.shape
    cout = p["w2"].shape[1]
    equal = (p["w1cat"].shape[1] == cout)    # packed shortcut <=> 2*cout cols
    if equal and stride != 1:
        # Matches the PyTorch WRN assumption (equalInOut implies stride 1).
        raise ValueError("identity shortcut requires stride == 1")

    # (1) conv1 (3x3, stride, pad 1) with bn2+ReLU fused into the epilogue;
    #     the 1x1 projection shortcut rides along as extra output columns.
    a1, (N1, OH, OW) = im2col(act, 3, 3, stride, 1)
    o1 = matmul_bn_relu(a1, p["w1cat"], p["scale_cat"],
                        p["shift_cat"], p["relu_cat"])
    if equal:
        o1a = o1                               # relu(bn2(conv1(act)))
        res = x.reshape(-1, cout)              # identity shortcut (f32)
    else:
        o1a = o1[:, :cout]                     # relu(bn2(conv1(act)))
        res = o1[:, cout:]                     # 1x1-stride-s shortcut (no relu)

    # (2) conv2 (3x3, stride 1, pad 1) with the residual add fused in and,
    #     for non-last blocks, the next block's bn1+ReLU fused as well.
    a2, _ = im2col(o1a.reshape(N1, OH, OW, cout), 3, 3, 1, 1)
    if next_sb is None:
        out = matmul_residual(a2, p["w2"], res)
        act_next = None
    else:
        out, act_next = matmul_residual_bn_relu(a2, p["w2"], res,
                                                next_sb[0], next_sb[1])
        act_next = act_next.reshape(N1, OH, OW, cout)
    return out.reshape(N1, OH, OW, cout), act_next


def init_basic_block_params(key, cin, cout):
    ks = jax.random.split(key, 11)
    p = {
        "bn1_gamma": jax.random.uniform(ks[0], (cin,), minval=0.5, maxval=1.5),
        "bn1_beta": 0.1 * jax.random.normal(ks[1], (cin,)),
        "bn1_mean": 0.1 * jax.random.normal(ks[2], (cin,)),
        "bn1_var": jax.random.uniform(ks[3], (cin,), minval=0.5, maxval=1.5),
        "bn2_gamma": jax.random.uniform(ks[4], (cout,), minval=0.5, maxval=1.5),
        "bn2_beta": 0.1 * jax.random.normal(ks[5], (cout,)),
        "bn2_mean": 0.1 * jax.random.normal(ks[6], (cout,)),
        "bn2_var": jax.random.uniform(ks[7], (cout,), minval=0.5, maxval=1.5),
        "conv1_w": jax.random.normal(ks[8], (cout, cin, 3, 3))
                   * (2.0 / (9 * cout)) ** 0.5,
        "conv2_w": jax.random.normal(ks[9], (cout, cout, 3, 3))
                   * (2.0 / (9 * cout)) ** 0.5,
    }
    if cin != cout:
        p["convs_w"] = jax.random.normal(ks[10], (cout, cin, 1, 1)) \
                       * (2.0 / cout) ** 0.5
    return p


def init_network_block(key, nb_layers, in_planes, out_planes):
    keys = jax.random.split(key, nb_layers)
    params = []
    for i in range(nb_layers):
        cin = in_planes if i == 0 else out_planes
        params.append(init_basic_block_params(keys[i], cin, out_planes))
    return params


def network_block_forward(x_nchw, params, stride):
    """NetworkBlock forward.  x_nchw: (N, C, H, W).  Returns NCHW."""
    x = jnp.transpose(x_nchw, (0, 2, 3, 1))     # -> NHWC
    L = len(params)
    act = None
    for i, p in enumerate(params):
        s = stride if i == 0 else 1
        if act is None:
            # Only the first block needs a standalone bn1+ReLU launch;
            # subsequent ones come fused out of the previous conv2 kernel.
            act = bn_relu_nhwc(x, p["s1"], p["b1"])
        next_sb = (params[i + 1]["s1"], params[i + 1]["b1"]) if i + 1 < L else None
        x, act = basic_block_forward(x, act, p, s, next_sb)
    return jnp.transpose(x, (0, 3, 1, 2))       # -> NCHW


# ----------------------------------------------------------------------------
# Pure-JAX reference (lax.conv, f32) for correctness check
# ----------------------------------------------------------------------------
def _conv_ref(x, w, stride, padding):
    return jax.lax.conv_general_dilated(
        x, jnp.transpose(w, (2, 3, 1, 0)),
        window_strides=(stride, stride),
        padding=[(padding, padding), (padding, padding)],
        dimension_numbers=("NHWC", "HWIO", "NHWC"))


def _bn_relu_ref(x, gamma, beta, mean, var):
    s = gamma * jax.lax.rsqrt(var + BN_EPS)
    return jnp.maximum(x * s + (beta - mean * s), 0.0)


def basic_block_ref(x, p, stride):
    cin = x.shape[-1]
    cout = p["conv1_w"].shape[0]
    equal = (cin == cout)
    act = _bn_relu_ref(x, p["bn1_gamma"], p["bn1_beta"],
                       p["bn1_mean"], p["bn1_var"])
    o = _conv_ref(act, p["conv1_w"], stride, 1)
    o = _bn_relu_ref(o, p["bn2_gamma"], p["bn2_beta"],
                     p["bn2_mean"], p["bn2_var"])
    o = _conv_ref(o, p["conv2_w"], 1, 1)
    res = x if equal else _conv_ref(act, p["convs_w"], stride, 0)
    return res + o


def network_block_ref(x_nchw, params, stride):
    x = jnp.transpose(x_nchw, (0, 2, 3, 1))
    for i, p in enumerate(params):
        x = basic_block_ref(x, p, stride if i == 0 else 1)
    return jnp.transpose(x, (0, 3, 1, 2))


# ----------------------------------------------------------------------------
if __name__ == "__main__":
    # NetworkBlock(nb_layers=2, in_planes=8, out_planes=16, block=BasicBlock, stride=2)
    nb_layers, in_planes, out_planes, stride = 2, 8, 16, 2
    key = jax.random.PRNGKey(0)
    kx, kp = jax.random.split(key)
    x = jax.random.normal(kx, (2, in_planes, 16, 16), jnp.float32)  # NCHW
    params = init_network_block(kp, nb_layers, in_planes, out_planes)
    kparams = prepare_network_block_params(params)   # folded BN + bf16 weights

    fwd = jax.jit(functools.partial(network_block_forward, stride=stride))
    out = fwd(x, kparams)
    jax.block_until_ready(out)

    ref = network_block_ref(x, params, stride)
    jax.block_until_ready(ref)

    assert out.shape == (2, out_planes, 8, 8), out.shape
    err = jnp.max(jnp.abs(out - ref)) / (jnp.max(jnp.abs(ref)) + 1e-6)
    # bf16 MXU operands with f32 accumulation: expect ~0.3-0.5% max rel error.
    assert err < 2e-2, f"mismatch vs reference: rel err {err}"

    print("KERNEL_OK")
</pallas_src>

<mosaic_0001>
module attributes {stable_mosaic.version = 11 : i64} {
  func.func @_bn_relu_kernel(%arg0: i32, %arg1: memref<16x128xf32, #tpu.memory_space<vmem>>, %arg2: memref<1x128xf32, #tpu.memory_space<vmem>>, %arg3: memref<1x128xf32, #tpu.memory_space<vmem>>, %arg4: memref<16x128xbf16, #tpu.memory_space<vmem>>) attributes {dimension_semantics = [#tpu.dimension_semantics<parallel>], iteration_bounds = array<i64: 2>, scalar_prefetch = 0 : i64, scratch_operands = 0 : i64, tpu.core_type = #tpu.core_type<tc>, window_params = [{transform_indices = @transform_0, window_bounds = array<i64: 16, 128>}, {pipeline_mode = #tpu.pipeline_mode<synchronous>, transform_indices = @transform_1, window_bounds = array<i64: 1, 128>}, {pipeline_mode = #tpu.pipeline_mode<synchronous>, transform_indices = @transform_2, window_bounds = array<i64: 1, 128>}, {transform_indices = @transform_3, window_bounds = array<i64: 16, 128>}]} {
    %c0 = arith.constant 0 : index
    %c0_0 = arith.constant 0 : index
    %0 = vector.load %arg1[%c0, %c0_0] : memref<16x128xf32, #tpu.memory_space<vmem>>, vector<16x128xf32>
    %c0_1 = arith.constant 0 : index
    %c0_2 = arith.constant 0 : index
    %1 = vector.load %arg2[%c0_1, %c0_2] : memref<1x128xf32, #tpu.memory_space<vmem>>, vector<1x128xf32>
    %2 = vector.broadcast %1 : vector<1x128xf32> to vector<16x128xf32>
    %3 = arith.mulf %0, %2 : vector<16x128xf32>
    %c0_3 = arith.constant 0 : index
    %c0_4 = arith.constant 0 : index
    %4 = vector.load %arg3[%c0_3, %c0_4] : memref<1x128xf32, #tpu.memory_space<vmem>>, vector<1x128xf32>
    %5 = vector.broadcast %4 : vector<1x128xf32> to vector<16x128xf32>
    %6 = arith.addf %3, %5 : vector<16x128xf32>
    %cst = arith.constant 0.000000e+00 : f32
    %7 = vector.broadcast %cst : f32 to vector<16x128xf32>
    %8 = arith.maximumf %6, %7 : vector<16x128xf32>
    %9 = arith.truncf %8 : vector<16x128xf32> to vector<16x128xbf16>
    %c0_5 = arith.constant 0 : index
    %c0_6 = arith.constant 0 : index
    %10 = vector.load %arg4[%c0_5, %c0_6] : memref<16x128xbf16, #tpu.memory_space<vmem>>, vector<16x128xbf16>
    tpu.vector_store %arg4[%c0_5, %c0_6], %9 {strides = array<i32>} : memref<16x128xbf16, #tpu.memory_space<vmem>>, vector<16x128xbf16>,
    return
  }
  func.func @transform_0(%arg0: i32) -> (i32, i32) {
    %c0_i32 = arith.constant 0 : i32
    %c0_i32_0 = arith.constant 0 : i32
    return %arg0, %c0_i32 : i32, i32
  }
  func.func @transform_1(%arg0: i32) -> (i32, i32) {
    %c0_i32 = arith.constant 0 : i32
    %c0_i32_0 = arith.constant 0 : i32
    %c0_i32_1 = arith.constant 0 : i32
    return %c0_i32, %c0_i32_0 : i32, i32
  }
  func.func @transform_2(%arg0: i32) -> (i32, i32) {
    %c0_i32 = arith.constant 0 : i32
    %c0_i32_0 = arith.constant 0 : i32
    %c0_i32_1 = arith.constant 0 : i32
    return %c0_i32, %c0_i32_0 : i32, i32
  }
  func.func @transform_3(%arg0: i32) -> (i32, i32) {
    %c0_i32 = arith.constant 0 : i32
    %c0_i32_0 = arith.constant 0 : i32
    return %arg0, %c0_i32 : i32, i32
  }
}

module attributes {stable_mosaic.version = 11 : i64} {
  func.func @_matmul_bn_relu_kernel(%arg0: i32, %arg1: memref<64x72xbf16, #tpu.memory_space<vmem>>, %arg2: memref<72x32xbf16, #tpu.memory_space<vmem>>, %arg3: memref<1x32xf32, #tpu.memory_space<vmem>>, %arg4: memref<1x32xf32, #tpu.memory_space<vmem>>, %arg5: memref<1x32xf32, #tpu.memory_space<vmem>>, %arg6: memref<64x32xbf16, #tpu.memory_space<vmem>>) attributes {dimension_semantics = [#tpu.dimension_semantics<parallel>], iteration_bounds = array<i64: 2>, scalar_prefetch = 0 : i64, scratch_operands = 0 : i64, tpu.core_type = #tpu.core_type<tc>, window_params = [{transform_indices = @transform_0, window_bounds = array<i64: 64, 72>}, {pipeline_mode = #tpu.pipeline_mode<synchronous>, transform_indices = @transform_1, window_bounds = array<i64: 72, 32>}, {pipeline_mode = #tpu.pipeline_mode<synchronous>, transform_indices = @transform_2, window_bounds = array<i64: 1, 32>}, {pipeline_mode = #tpu.pipeline_mode<synchronous>, transform_indices = @transform_3, window_bounds = array<i64: 1, 32>}, {pipeline_mode = #tpu.pipeline_mode<synchronous>, transform_indices = @transform_4, window_bounds = array<i64: 1, 32>}, {transform_indices = @transform_5, window_bounds = array<i64: 64, 32>}]} {
    %c0 = arith.constant 0 : index
    %c0_0 = arith.constant 0 : index
    %0 = vector.load %arg1[%c0, %c0_0] : memref<64x72xbf16, #tpu.memory_space<vmem>>, vector<64x72xbf16>
    %c0_1 = arith.constant 0 : index
    %c0_2 = arith.constant 0 : index
    %1 = vector.load %arg2[%c0_1, %c0_2] : memref<72x32xbf16, #tpu.memory_space<vmem>>, vector<72x32xbf16>
    %cst = arith.constant dense<0.000000e+00> : vector<64x32xf32>
    %2 = tpu.matmul %0, %1, %cst {dimension_numbers = #tpu.dot_dimension_numbers<[1], [0], [0], [1], [0, 0, 1, 1], [], []>} : vector<64x72xbf16>, vector<72x32xbf16>, vector<64x32xf32> -> vector<64x32xf32>
    %c0_3 = arith.constant 0 : index
    %c0_4 = arith.constant 0 : index
    %3 = vector.load %arg3[%c0_3, %c0_4] : memref<1x32xf32, #tpu.memory_space<vmem>>, vector<1x32xf32>
    %4 = vector.broadcast %3 : vector<1x32xf32> to vector<64x32xf32>
    %5 = arith.mulf %2, %4 : vector<64x32xf32>
    %c0_5 = arith.constant 0 : index
    %c0_6 = arith.constant 0 : index
    %6 = vector.load %arg4[%c0_5, %c0_6] : memref<1x32xf32, #tpu.memory_space<vmem>>, vector<1x32xf32>
    %7 = vector.broadcast %6 : vector<1x32xf32> to vector<64x32xf32>
    %8 = arith.addf %5, %7 : vector<64x32xf32>
    %c0_7 = arith.constant 0 : index
    %c0_8 = arith.constant 0 : index
    %9 = vector.load %arg5[%c0_7, %c0_8] : memref<1x32xf32, #tpu.memory_space<vmem>>, vector<1x32xf32>
    %cst_9 = arith.constant 0.000000e+00 : f32
    %10 = vector.broadcast %cst_9 : f32 to vector<1x32xf32>
    %11 = arith.cmpf ogt, %9, %10 : vector<1x32xf32>
    %cst_10 = arith.constant 0.000000e+00 : f32
    %12 = vector.broadcast %cst_10 : f32 to vector<64x32xf32>
    %13 = arith.maximumf %8, %12 : vector<64x32xf32>
    %14 = vector.shape_cast %11 : vector<1x32xi1> to vector<1x32xi1>
    %15 = vector.broadcast %14 : vector<1x32xi1> to vector<64x32xi1>
    %16 = arith.select %15, %13, %8 : vector<64x32xi1>, vector<64x32xf32>
    %17 = arith.truncf %16 : vector<64x32xf32> to vector<64x32xbf16>
    %c0_11 = arith.constant 0 : index
    %c0_12 = arith.constant 0 : index
    %18 = vector.load %arg6[%c0_11, %c0_12] : memref<64x32xbf16, #tpu.memory_space<vmem>>, vector<64x32xbf16>
    tpu.vector_store %arg6[%c0_11, %c0_12], %17 {strides = array<i32>} : memref<64x32xbf16, #tpu.memory_space<vmem>>, vector<64x32xbf16>,
    return
  }
  func.func @transform_0(%arg0: i32) -> (i32, i32) {
    %c0_i32 = arith.constant 0 : i32
    %c0_i32_0 = arith.constant 0 : i32
    return %arg0, %c0_i32 : i32, i32
  }
  func.func @transform_1(%arg0: i32) -> (i32, i32) {
    %c0_i32 = arith.constant 0 : i32
    %c0_i32_0 = arith.constant 0 : i32
    %c0_i32_1 = arith.constant 0 : i32
    return %c0_i32, %c0_i32_0 : i32, i32
  }
  func.func @transform_2(%arg0: i32) -> (i32, i32) {
    %c0_i32 = arith.constant 0 : i32
    %c0_i32_0 = arith.constant 0 : i32
    %c0_i32_1 = arith.constant 0 : i32
    return %c0_i32, %c0_i32_0 : i32, i32
  }
  func.func @transform_3(%arg0: i32) -> (i32, i32) {
    %c0_i32 = arith.constant 0 : i32
    %c0_i32_0 = arith.constant 0 : i32
    %c0_i32_1 = arith.constant 0 : i32
    return %c0_i32, %c0_i32_0 : i32, i32
  }
  func.func @transform_4(%arg0: i32) -> (i32, i32) {
    %c0_i32 = arith.constant 0 : i32
    %c0_i32_0 = arith.constant 0 : i32
    %c0_i32_1 = arith.constant 0 : i32
    return %c0_i32, %c0_i32_0 : i32, i32
  }
  func.func @transform_5(%arg0: i32) -> (i32, i32) {
    %c0_i32 = arith.constant 0 : i32
    %c0_i32_0 = arith.constant 0 : i32
    return %arg0, %c0_i32 : i32, i32
  }
}

module attributes {stable_mosaic.version = 11 : i64} {
  func.func @_matmul_residual_bn_relu_kernel(%arg0: i32, %arg1: memref<64x144xbf16, #tpu.memory_space<vmem>>, %arg2: memref<144x16xbf16, #tpu.memory_space<vmem>>, %arg3: memref<64x16xbf16, #tpu.memory_space<vmem>>, %arg4: memref<1x16xf32, #tpu.memory_space<vmem>>, %arg5: memref<1x16xf32, #tpu.memory_space<vmem>>, %arg6: memref<64x16xf32, #tpu.memory_space<vmem>>, %arg7: memref<64x16xbf16, #tpu.memory_space<vmem>>) attributes {dimension_semantics = [#tpu.dimension_semantics<parallel>], iteration_bounds = array<i64: 2>, scalar_prefetch = 0 : i64, scratch_operands = 0 : i64, tpu.core_type = #tpu.core_type<tc>, window_params = [{transform_indices = @transform_0, window_bounds = array<i64: 64, 144>}, {pipeline_mode = #tpu.pipeline_mode<synchronous>, transform_indices = @transform_1, window_bounds = array<i64: 144, 16>}, {transform_indices = @transform_2, window_bounds = array<i64: 64, 16>}, {pipeline_mode = #tpu.pipeline_mode<synchronous>, transform_indices = @transform_3, window_bounds = array<i64: 1, 16>}, {pipeline_mode = #tpu.pipeline_mode<synchronous>, transform_indices = @transform_4, window_bounds = array<i64: 1, 16>}, {transform_indices = @transform_5, window_bounds = array<i64: 64, 16>}, {transform_indices = @transform_6, window_bounds = array<i64: 64, 16>}]} {
    %c0 = arith.constant 0 : index
    %c0_0 = arith.constant 0 : index
    %0 = vector.load %arg1[%c0, %c0_0] : memref<64x144xbf16, #tpu.memory_space<vmem>>, vector<64x144xbf16>
    %c0_1 = arith.constant 0 : index
    %c0_2 = arith.constant 0 : index
    %1 = vector.load %arg2[%c0_1, %c0_2] : memref<144x16xbf16, #tpu.memory_space<vmem>>, vector<144x16xbf16>
    %cst = arith.constant dense<0.000000e+00> : vector<64x16xf32>
    %2 = tpu.matmul %0, %1, %cst {dimension_numbers = #tpu.dot_dimension_numbers<[1], [0], [0], [1], [0, 0, 1, 1], [], []>} : vector<64x144xbf16>, vector<144x16xbf16>, vector<64x16xf32> -> vector<64x16xf32>
    %c0_3 = arith.constant 0 : index
    %c0_4 = arith.constant 0 : index
    %3 = vector.load %arg3[%c0_3, %c0_4] : memref<64x16xbf16, #tpu.memory_space<vmem>>, vector<64x16xbf16>
    %4 = arith.extf %3 : vector<64x16xbf16> to vector<64x16xf32>
    %5 = arith.addf %2, %4 : vector<64x16xf32>
    %c0_5 = arith.constant 0 : index
    %c0_6 = arith.constant 0 : index
    %6 = vector.load %arg6[%c0_5, %c0_6] : memref<64x16xf32, #tpu.memory_space<vmem>>, vector<64x16xf32>
    tpu.vector_store %arg6[%c0_5, %c0_6], %5 {strides = array<i32>} : memref<64x16xf32, #tpu.memory_space<vmem>>, vector<64x16xf32>,
    %c0_7 = arith.constant 0 : index
    %c0_8 = arith.constant 0 : index
    %7 = vector.load %arg4[%c0_7, %c0_8] : memref<1x16xf32, #tpu.memory_space<vmem>>, vector<1x16xf32>
    %8 = vector.broadcast %7 : vector<1x16xf32> to vector<64x16xf32>
    %9 = arith.mulf %5, %8 : vector<64x16xf32>
    %c0_9 = arith.constant 0 : index
    %c0_10 = arith.constant 0 : index
    %10 = vector.load %arg5[%c0_9, %c0_10] : memref<1x16xf32, #tpu.memory_space<vmem>>, vector<1x16xf32>
    %11 = vector.broadcast %10 : vector<1x16xf32> to vector<64x16xf32>
    %12 = arith.addf %9, %11 : vector<64x16xf32>
    %cst_11 = arith.constant 0.000000e+00 : f32
    %13 = vector.broadcast %cst_11 : f32 to vector<64x16xf32>
    %14 = arith.maximumf %12, %13 : vector<64x16xf32>
    %15 = arith.truncf %14 : vector<64x16xf32> to vector<64x16xbf16>
    %c0_12 = arith.constant 0 : index
    %c0_13 = arith.constant 0 : index
    %16 = vector.load %arg7[%c0_12, %c0_13] : memref<64x16xbf16, #tpu.memory_space<vmem>>, vector<64x16xbf16>
    tpu.vector_store %arg7[%c0_12, %c0_13], %15 {strides = array<i32>} : memref<64x16xbf16, #tpu.memory_space<vmem>>, vector<64x16xbf16>,
    return
  }
  func.func @transform_0(%arg0: i32) -> (i32, i32) {
    %c0_i32 = arith.constant 0 : i32
    %c0_i32_0 = arith.constant 0 : i32
    return %arg0, %c0_i32 : i32, i32
  }
  func.func @transform_1(%arg0: i32) -> (i32, i32) {
    %c0_i32 = arith.constant 0 : i32
    %c0_i32_0 = arith.constant 0 : i32
    %c0_i32_1 = arith.constant 0 : i32
    return %c0_i32, %c0_i32_0 : i32, i32
  }
  func.func @transform_2(%arg0: i32) -> (i32, i32) {
    %c0_i32 = arith.constant 0 : i32
    %c0_i32_0 = arith.constant 0 : i32
    return %arg0, %c0_i32 : i32, i32
  }
  func.func @transform_3(%arg0: i32) -> (i32, i32) {
    %c0_i32 = arith.constant 0 : i32
    %c0_i32_0 = arith.constant 0 : i32
    %c0_i32_1 = arith.constant 0 : i32
    return %c0_i32, %c0_i32_0 : i32, i32
  }
  func.func @transform_4(%arg0: i32) -> (i32, i32) {
    %c0_i32 = arith.constant 0 : i32
    %c0_i32_0 = arith.constant 0 : i32
    %c0_i32_1 = arith.constant 0 : i32
    return %c0_i32, %c0_i32_0 : i32, i32
  }
  func.func @transform_5(%arg0: i32) -> (i32, i32) {
    %c0_i32 = arith.constant 0 : i32
    %c0_i32_0 = arith.constant 0 : i32
    return %arg0, %c0_i32 : i32, i32
  }
  func.func @transform_6(%arg0: i32) -> (i32, i32) {
    %c0_i32 = arith.constant 0 : i32
    %c0_i32_0 = arith.constant 0 : i32
    return %arg0, %c0_i32 : i32, i32
  }
}

module attributes {stable_mosaic.version = 11 : i64} {
  func.func @_matmul_bn_relu_kernel(%arg0: i32, %arg1: memref<64x144xbf16, #tpu.memory_space<vmem>>, %arg2: memref<144x16xbf16, #tpu.memory_space<vmem>>, %arg3: memref<1x16xf32, #tpu.memory_space<vmem>>, %arg4: memref<1x16xf32, #tpu.memory_space<vmem>>, %arg5: memref<1x16xf32, #tpu.memory_space<vmem>>, %arg6: memref<64x16xbf16, #tpu.memory_space<vmem>>) attributes {dimension_semantics = [#tpu.dimension_semantics<parallel>], iteration_bounds = array<i64: 2>, scalar_prefetch = 0 : i64, scratch_operands = 0 : i64, tpu.core_type = #tpu.core_type<tc>, window_params = [{transform_indices = @transform_0, window_bounds = array<i64: 64, 144>}, {pipeline_mode = #tpu.pipeline_mode<synchronous>, transform_indices = @transform_1, window_bounds = array<i64: 144, 16>}, {pipeline_mode = #tpu.pipeline_mode<synchronous>, transform_indices = @transform_2, window_bounds = array<i64: 1, 16>}, {pipeline_mode = #tpu.pipeline_mode<synchronous>, transform_indices = @transform_3, window_bounds = array<i64: 1, 16>}, {pipeline_mode = #tpu.pipeline_mode<synchronous>, transform_indices = @transform_4, window_bounds = array<i64: 1, 16>}, {transform_indices = @transform_5, window_bounds = array<i64: 64, 16>}]} {
    %c0 = arith.constant 0 : index
    %c0_0 = arith.constant 0 : index
    %0 = vector.load %arg1[%c0, %c0_0] : memref<64x144xbf16, #tpu.memory_space<vmem>>, vector<64x144xbf16>
    %c0_1 = arith.constant 0 : index
    %c0_2 = arith.constant 0 : index
    %1 = vector.load %arg2[%c0_1, %c0_2] : memref<144x16xbf16, #tpu.memory_space<vmem>>, vector<144x16xbf16>
    %cst = arith.constant dense<0.000000e+00> : vector<64x16xf32>
    %2 = tpu.matmul %0, %1, %cst {dimension_numbers = #tpu.dot_dimension_numbers<[1], [0], [0], [1], [0, 0, 1, 1], [], []>} : vector<64x144xbf16>, vector<144x16xbf16>, vector<64x16xf32> -> vector<64x16xf32>
    %c0_3 = arith.constant 0 : index
    %c0_4 = arith.constant 0 : index
    %3 = vector.load %arg3[%c0_3, %c0_4] : memref<1x16xf32, #tpu.memory_space<vmem>>, vector<1x16xf32>
    %4 = vector.broadcast %3 : vector<1x16xf32> to vector<64x16xf32>
    %5 = arith.mulf %2, %4 : vector<64x16xf32>
    %c0_5 = arith.constant 0 : index
    %c0_6 = arith.constant 0 : index
    %6 = vector.load %arg4[%c0_5, %c0_6] : memref<1x16xf32, #tpu.memory_space<vmem>>, vector<1x16xf32>
    %7 = vector.broadcast %6 : vector<1x16xf32> to vector<64x16xf32>
    %8 = arith.addf %5, %7 : vector<64x16xf32>
    %c0_7 = arith.constant 0 : index
    %c0_8 = arith.constant 0 : index
    %9 = vector.load %arg5[%c0_7, %c0_8] : memref<1x16xf32, #tpu.memory_space<vmem>>, vector<1x16xf32>
    %cst_9 = arith.constant 0.000000e+00 : f32
    %10 = vector.broadcast %cst_9 : f32 to vector<1x16xf32>
    %11 = arith.cmpf ogt, %9, %10 : vector<1x16xf32>
    %cst_10 = arith.constant 0.000000e+00 : f32
    %12 = vector.broadcast %cst_10 : f32 to vector<64x16xf32>
    %13 = arith.maximumf %8, %12 : vector<64x16xf32>
    %14 = vector.shape_cast %11 : vector<1x16xi1> to vector<1x16xi1>
    %15 = vector.broadcast %14 : vector<1x16xi1> to vector<64x16xi1>
    %16 = arith.select %15, %13, %8 : vector<64x16xi1>, vector<64x16xf32>
    %17 = arith.truncf %16 : vector<64x16xf32> to vector<64x16xbf16>
    %c0_11 = arith.constant 0 : index
    %c0_12 = arith.constant 0 : index
    %18 = vector.load %arg6[%c0_11, %c0_12] : memref<64x16xbf16, #tpu.memory_space<vmem>>, vector<64x16xbf16>
    tpu.vector_store %arg6[%c0_11, %c0_12], %17 {strides = array<i32>} : memref<64x16xbf16, #tpu.memory_space<vmem>>, vector<64x16xbf16>,
    return
  }
  func.func @transform_0(%arg0: i32) -> (i32, i32) {
    %c0_i32 = arith.constant 0 : i32
    %c0_i32_0 = arith.constant 0 : i32
    return %arg0, %c0_i32 : i32, i32
  }
  func.func @transform_1(%arg0: i32) -> (i32, i32) {
    %c0_i32 = arith.constant 0 : i32
    %c0_i32_0 = arith.constant 0 : i32
    %c0_i32_1 = arith.constant 0 : i32
    return %c0_i32, %c0_i32_0 : i32, i32
  }
  func.func @transform_2(%arg0: i32) -> (i32, i32) {
    %c0_i32 = arith.constant 0 : i32
    %c0_i32_0 = arith.constant 0 : i32
    %c0_i32_1 = arith.constant 0 : i32
    return %c0_i32, %c0_i32_0 : i32, i32
  }
  func.func @transform_3(%arg0: i32) -> (i32, i32) {
    %c0_i32 = arith.constant 0 : i32
    %c0_i32_0 = arith.constant 0 : i32
    %c0_i32_1 = arith.constant 0 : i32
    return %c0_i32, %c0_i32_0 : i32, i32
  }
  func.func @transform_4(%arg0: i32) -> (i32, i32) {
    %c0_i32 = arith.constant 0 : i32
    %c0_i32_0 = arith.constant 0 : i32
    %c0_i32_1 = arith.constant 0 : i32
    return %c0_i32, %c0_i32_0 : i32, i32
  }
  func.func @transform_5(%arg0: i32) -> (i32, i32) {
    %c0_i32 = arith.constant 0 : i32
    %c0_i32_0 = arith.constant 0 : i32
    return %arg0, %c0_i32 : i32, i32
  }
}

module attributes {stable_mosaic.version = 11 : i64} {
  func.func @_matmul_residual_kernel(%arg0: i32, %arg1: memref<64x144xbf16, #tpu.memory_space<vmem>>, %arg2: memref<144x16xbf16, #tpu.memory_space<vmem>>, %arg3: memref<64x16xf32, #tpu.memory_space<vmem>>, %arg4: memref<64x16xf32, #tpu.memory_space<vmem>>) attributes {dimension_semantics = [#tpu.dimension_semantics<parallel>], iteration_bounds = array<i64: 2>, scalar_prefetch = 0 : i64, scratch_operands = 0 : i64, tpu.core_type = #tpu.core_type<tc>, window_params = [{transform_indices = @transform_0, window_bounds = array<i64: 64, 144>}, {pipeline_mode = #tpu.pipeline_mode<synchronous>, transform_indices = @transform_1, window_bounds = array<i64: 144, 16>}, {transform_indices = @transform_2, window_bounds = array<i64: 64, 16>}, {transform_indices = @transform_3, window_bounds = array<i64: 64, 16>}]} {
    %c0 = arith.constant 0 : index
    %c0_0 = arith.constant 0 : index
    %0 = vector.load %arg1[%c0, %c0_0] : memref<64x144xbf16, #tpu.memory_space<vmem>>, vector<64x144xbf16>
    %c0_1 = arith.constant 0 : index
    %c0_2 = arith.constant 0 : index
    %1 = vector.load %arg2[%c0_1, %c0_2] : memref<144x16xbf16, #tpu.memory_space<vmem>>, vector<144x16xbf16>
    %cst = arith.constant dense<0.000000e+00> : vector<64x16xf32>
    %2 = tpu.matmul %0, %1, %cst {dimension_numbers = #tpu.dot_dimension_numbers<[1], [0], [0], [1], [0, 0, 1, 1], [], []>} : vector<64x144xbf16>, vector<144x16xbf16>, vector<64x16xf32> -> vector<64x16xf32>
    %c0_3 = arith.constant 0 : index
    %c0_4 = arith.constant 0 : index
    %3 = vector.load %arg3[%c0_3, %c0_4] : memref<64x16xf32, #tpu.memory_space<vmem>>, vector<64x16xf32>
    %4 = arith.addf %2, %3 : vector<64x16xf32>
    %c0_5 = arith.constant 0 : index
    %c0_6 = arith.constant 0 : index
    %5 = vector.load %arg4[%c0_5, %c0_6] : memref<64x16xf32, #tpu.memory_space<vmem>>, vector<64x16xf32>
    tpu.vector_store %arg4[%c0_5, %c0_6], %4 {strides = array<i32>} : memref<64x16xf32, #tpu.memory_space<vmem>>, vector<64x16xf32>,
    return
  }
  func.func @transform_0(%arg0: i32) -> (i32, i32) {
    %c0_i32 = arith.constant 0 : i32
    %c0_i32_0 = arith.constant 0 : i32
    return %arg0, %c0_i32 : i32, i32
  }
  func.func @transform_1(%arg0: i32) -> (i32, i32) {
    %c0_i32 = arith.constant 0 : i32
    %c0_i32_0 = arith.constant 0 : i32
    %c0_i32_1 = arith.constant 0 : i32
    return %c0_i32, %c0_i32_0 : i32, i32
  }
  func.func @transform_2(%arg0: i32) -> (i32, i32) {
    %c0_i32 = arith.constant 0 : i32
    %c0_i32_0 = arith.constant 0 : i32
    return %arg0, %c0_i32 : i32, i32
  }
  func.func @transform_3(%arg0: i32) -> (i32, i32) {
    %c0_i32 = arith.constant 0 : i32
    %c0_i32_0 = arith.constant 0 : i32
    return %arg0, %c0_i32 : i32, i32
  }
}

</mosaic_0001>

<llo_original>
// kernel: tile.13
$region0: #{tile.13}
  #allocation0 [shape = 's32[1]{0}', space=sflag, size = 0x4, scoped, tag = 'scoped memory for tile.13']
  %s0 = inlined_call_operand.vmem [shape: f32[8], index: 0, kind: input, shape index: {}]
  %s1 = inlined_call_operand.vmem [shape: f32[16,8], index: 1, kind: output, shape index: {}]
  // Predicated region
  $region2: #{tile.13} parent=0 // pred_check
    _
  $region3: #{tile.13} parent=0 // pred_check_branch
    %3 = sbr.rel (0) target = $region5
  $region4: #{tile.13} parent=0 // pred_region
    _
  $region5: #{tile.13} parent=0 // pred_fallthru
    _
  %v4 = vld [vmem:[%s0] ss:$0 sm:$0xff]
  %5 = vst [vmem:[%s1] sm:$0xff] %v4
  %s6 = scalar_lea.vmem %s1, 8
  %7 = vst [vmem:[%s6] sm:$0xff] %v4

// kernel: tile.14
$region0: #{tile.14}
  %s0 = inlined_call_operand.vmem [shape: f32[16,8], index: 0, kind: input, shape index: {}]
  %s1 = inlined_call_operand.vmem [shape: f32[1,128], index: 1, kind: output, shape index: {}]
  $region1: #{tile.14} parent=0
    #allocation0 [shape = 'u8[4096]{0}', space=vmem, size = 0x1000, scoped, tag = 'scoped mem for output reshape']
    %v2 = vld [vmem:[%s0] sm:$0x1]
    %vm3 = vcmask 64512
    %4 = vst.msk [vmem:[#allocation0] sm:$0x1] %vm3, %v2
    %s5 = scalar_lea.vmem %s0, 15
    %v6 = vld [vmem:[%s5] sm:$0x1]
    %7 = vrot.lane.b32.xlu0 %v6, 120
    %v8 = vpop.permute.xlu0 %7
    %vm9 = vcmask 1048512
    %10 = vst.msk [vmem:[#allocation0] sm:$0x1] %vm9, %v8
    %s11 = scalar_lea.vmem %s0, 14
    %v12 = vld [vmem:[%s11] sm:$0x1]
    %13 = vrot.lane.b32.xlu0 %v12, 112
    %v14 = vpop.permute.xlu0 %13
    %vm15 = vcmask 982912
    %16 = vst.msk [vmem:[#allocation0] sm:$0x1] %vm15, %v14
    %s17 = scalar_lea.vmem %s0, 13
    %v18 = vld [vmem:[%s17] sm:$0x1]
    %19 = vrot.lane.b32.xlu0 %v18, 104
    %v20 = vpop.permute.xlu0 %19
    %vm21 = vcmask 917312
    %22 = vst.msk [vmem:[#allocation0] sm:$0x1] %vm21, %v20
    %s23 = scalar_lea.vmem %s0, 12
    %v24 = vld [vmem:[%s23] sm:$0x1]
    %25 = vrot.lane.b32.xlu0 %v24, 96
    %v26 = vpop.permute.xlu0 %25
    %vm27 = vcmask 851712
    %28 = vst.msk [vmem:[#allocation0] sm:$0x1] %vm27, %v26
    %s29 = scalar_lea.vmem %s0, 11
    %v30 = vld [vmem:[%s29] sm:$0x1]
    %31 = vrot.lane.b32.xlu0 %v30, 88
    %v32 = vpop.permute.xlu0 %31
    %vm33 = vcmask 786112
    %34 = vst.msk [vmem:[#allocation0] sm:$0x1] %vm33, %v32
    %s35 = scalar_lea.vmem %s0, 10
    %v36 = vld [vmem:[%s35] sm:$0x1]
    %37 = vrot.lane.b32.xlu0 %v36, 80
    %v38 = vpop.permute.xlu0 %37
    %vm39 = vcmask 720512
    %40 = vst.msk [vmem:[#allocation0] sm:$0x1] %vm39, %v38
    %s41 = scalar_lea.vmem %s0, 9
    %v42 = vld [vmem:[%s41] sm:$0x1]
    %43 = vrot.lane.b32.xlu0 %v42, 72
    %v44 = vpop.permute.xlu0 %43
    %vm45 = vcmask 654912
    %46 = vst.msk [vmem:[#allocation0] sm:$0x1] %vm45, %v44
    %s47 = scalar_lea.vmem %s0, 8
    %v48 = vld [vmem:[%s47] sm:$0x1]
    %49 = vrot.lane.b32.xlu0 %v48, 64
    %v50 = vpop.permute.xlu0 %49
    %vm51 = vcmask 589312
    %52 = vst.msk [vmem:[#allocation0] sm:$0x1] %vm51, %v50
    %s53 = scalar_lea.vmem %s0, 7
    %v54 = vld [vmem:[%s53] sm:$0x1]
    %55 = vrot.lane.b32.xlu0 %v54, 56
    %v56 = vpop.permute.xlu0 %55
    %vm57 = vcmask 523712
    %58 = vst.msk [vmem:[#allocation0] sm:$0x1] %vm57, %v56
    %s59 = scalar_lea.vmem %s0, 6
    %v60 = vld [vmem:[%s59] sm:$0x1]
    %61 = vrot.lane.b32.xlu0 %v60, 48
    %v62 = vpop.permute.xlu0 %61
    %vm63 = vcmask 458112
    %64 = vst.msk [vmem:[#allocation0] sm:$0x1] %vm63, %v62
    %s65 = scalar_lea.vmem %s0, 5
    %v66 = vld [vmem:[%s65] sm:$0x1]
    %67 = vrot.lane.b32.xlu0 %v66, 40
    %v68 = vpop.permute.xlu0 %67
    %vm69 = vcmask 392512
    %70 = vst.msk [vmem:[#allocation0] sm:$0x1] %vm69, %v68
    %s71 = scalar_lea.vmem %s0, 4
    %v72 = vld [vmem:[%s71] sm:$0x1]
    %73 = vrot.lane.b32.xlu0 %v72, 32
    %v74 = vpop.permute.xlu0 %73
    %vm75 = vcmask 326912
    %76 = vst.msk [vmem:[#allocation0] sm:$0x1] %vm75, %v74
    %s77 = scalar_lea.vmem %s0, 3
    %v78 = vld [vmem:[%s77] sm:$0x1]
    %79 = vrot.lane.b32.xlu0 %v78, 24
    %v80 = vpop.permute.xlu0 %79
    %vm81 = vcmask 261312
    %82 = vst.msk [vmem:[#allocation0] sm:$0x1] %vm81, %v80
    %s83 = scalar_lea.vmem %s0, 2
    %v84 = vld [vmem:[%s83] sm:$0x1]
    %85 = vrot.lane.b32.xlu0 %v84, 16
    %v86 = vpop.permute.xlu0 %85
    %vm87 = vcmask 195712
    %88 = vst.msk [vmem:[#allocation0] sm:$0x1] %vm87, %v86
    %s89 = scalar_lea.vmem %s0, 1
    %v90 = vld [vmem:[%s89] sm:$0x1]
    %91 = vrot.lane.b32.xlu0 %v90, 8
    %v92 = vpop.permute.xlu0 %91
    %vm93 = vcmask 130112
    %94 = vst.msk [vmem:[#allocation0] sm:$0x1] %vm93, %v92
    %s96 = sshll.u32 1, 1
    %s97 = ssub.s32 %s96, 1
    %v99 = vld [vmem:[#allocation0] sm:%s97]
    %s100 = sshll.u32 1, 1
    %s101 = ssub.s32 %s100, 1
    %102 = vst [vmem:[%s1] sm:%s101] %v99

// kernel: network_block_forward.5
$region0: #{network_block_forward.5}
  #allocation0 [shape = 'u32[]', space=smem, size = 0x4, offset = 0x4, fixed_abs, tag = 'smem constant byte address 0x4 - core index']
  #allocation1 [shape = 'u32[144,128]{1,0:T(1,128)}', space=vmem, size = 0x12000, scoped, tag = 'internal scratch']
  %s0 = inlined_call_operand.vmem [shape: f32[32,128], index: 0, kind: input, shape index: {}]
  %s1 = inlined_call_operand.vmem [shape: f32[1,128], index: 1, kind: input, shape index: {}]
  %s2 = inlined_call_operand.vmem [shape: f32[1,128], index: 2, kind: input, shape index: {}]
  %s3 = inlined_call_operand.vmem [shape: bf16[32,128], index: 3, kind: output, shape index: {}]
  %s4 = sld [smem:[#allocation0]]
  $region45: #{network_block_forward.5} parent=0
    _
  %s6 = ssub.s32 1, %s4
  %s7 = scalar_select 0, %s6, %s4
  loop: start=0, step=1, limit=4
  $region2: #{network_block_forward.5} parent=0 // loop_pre_header
    _
  $region3: #{network_block_forward.5} parent=0 // loop_header
    %s9 = sphi 0, %s13
    %p10 = scmp.ge.s32.totalorder %s9, 4
    %s19 = sphi 0, %s21
    %s22 = sphi 0, %s19
    %s23 = sphi 0, %s22
    %s39 = sphi 0, %s23
    %s43 = sphi 0, %s43
    %s45 = sphi 0, %s43
    %s46 = sphi 0, %s45
    %s60 = sphi 0, %s46
    %s64 = sphi 0, %s64
    %s66 = sphi 0, %s64
    %s67 = sphi 0, %s66
    %s81 = sphi 0, %s67
    %s87 = sphi 0, %s89
    %s90 = sphi 0, %s87
    %s91 = sphi 0, %s90
    %s107 = sphi 0, %s91
  $region4: #{network_block_forward.5} parent=0 // loop_header_branch
    %12 = sbr.rel (%p10) target = $region8
  $region5: #{network_block_forward.5} parent=0 // loop_body
    %s14 = ssub.s32 %s9, 1
    %s15 = ssub.s32 %s9, 2
    %s16 = sadd.s32 %s9, 1
    %s17 = ssub.s32 %s9, %s16
    %p18 = scmp.eq.s32.totalorder %s17, 0
    %s20 = sadd.s32 %s19, 1
    %s21 = scalar_select %p18, %s19, %s20
    %p24 = pneg %p18
    %p25 = scmp.eq.s32.totalorder %s9, 1
    %p26 = por %p24, %p25
    %p27 = scmp.ne.s32.totalorder %s19, %s22
    %p28 = scmp.eq.s32.totalorder %s9, 0
    %p29 = por %p27, %p28
    %p30 = scmp.ne.s32.totalorder %s19, %s22
    %p31 = scmp.eq.s32.totalorder %s14, 1
    %p32 = por %p30, %p31
    %p33 = scmp.ne.s32.totalorder %s22, %s23
    %p34 = scmp.eq.s32.totalorder %s14, 0
    %p35 = por %p33, %p34
    %p36 = scmp.ne.s32.totalorder %s22, %s23
    %p37 = scmp.eq.s32.totalorder %s15, 1
    %p38 = por %p36, %p37
    %p40 = scmp.ne.s32.totalorder %s23, %s39
    %p41 = scmp.eq.s32.totalorder %s15, 0
    %p42 = por %p40, %p41
    %s44 = sadd.s32 %s43, 1
    %p47 = scmp.eq.s32.totalorder %s9, 1
    %p48 = scmp.ne.s32.totalorder %s43, %s45
    %p49 = scmp.eq.s32.totalorder %s9, 0
    %p50 = por %p48, %p49
    %p51 = scmp.ne.s32.totalorder %s43, %s45
    %p52 = scmp.eq.s32.totalorder %s14, 1
    %p53 = por %p51, %p52
    %p54 = scmp.ne.s32.totalorder %s45, %s46
    %p55 = scmp.eq.s32.totalorder %s14, 0
    %p56 = por %p54, %p55
    %p57 = scmp.ne.s32.totalorder %s45, %s46
    %p58 = scmp.eq.s32.totalorder %s15, 1
    %p59 = por %p57, %p58
    %p61 = scmp.ne.s32.totalorder %s46, %s60
    %p62 = scmp.eq.s32.totalorder %s15, 0
    %p63 = por %p61, %p62
    %s65 = sadd.s32 %s64, 1
    %p68 = scmp.eq.s32.totalorder %s9, 1
    %p69 = scmp.ne.s32.totalorder %s64, %s66
    %p70 = scmp.eq.s32.totalorder %s9, 0
    %p71 = por %p69, %p70
    %p72 = scmp.ne.s32.totalorder %s64, %s66
    %p73 = scmp.eq.s32.totalorder %s14, 1
    %p74 = por %p72, %p73
    %p75 = scmp.ne.s32.totalorder %s66, %s67
    %p76 = scmp.eq.s32.totalorder %s14, 0
    %p77 = por %p75, %p76
    %p78 = scmp.ne.s32.totalorder %s66, %s67
    %p79 = scmp.eq.s32.totalorder %s15, 1
    %p80 = por %p78, %p79
    %p82 = scmp.ne.s32.totalorder %s67, %s81
    %p83 = scmp.eq.s32.totalorder %s15, 0
    %p84 = por %p82, %p83
    %s85 = ssub.s32 %s9, %s16
    %p86 = scmp.eq.s32.totalorder %s85, 0
    %s88 = sadd.s32 %s87, 1
    %s89 = scalar_select %p86, %s87, %s88
    %p92 = pneg %p86
    %p93 = scmp.eq.s32.totalorder %s9, 1
    %p94 = por %p92, %p93
    %p95 = scmp.ne.s32.totalorder %s87, %s90
    %p96 = scmp.eq.s32.totalorder %s9, 0
    %p97 = por %p95, %p96
    %p98 = scmp.ne.s32.totalorder %s87, %s90
    %p99 = scmp.eq.s32.totalorder %s14, 1
    %p100 = por %p98, %p99
    %p101 = scmp.ne.s32.totalorder %s90, %s91
    %p102 = scmp.eq.s32.totalorder %s14, 0
    %p103 = por %p101, %p102
    %p104 = scmp.ne.s32.totalorder %s90, %s91
    %p105 = scmp.eq.s32.totalorder %s15, 1
    %p106 = por %p104, %p105
    %p108 = scmp.ne.s32.totalorder %s91, %s107
    %p109 = scmp.eq.s32.totalorder %s15, 0
    %p110 = por %p108, %p109
    %p111 = scmp.le.s32.totalorder 1, %s9
    %p112 = scmp.lt.s32.totalorder %s9, 3
    %p113 = pnand %p111, %p112
    %p114 = pneg %p113
    // Predicated region
    $region9: #{network_block_forward.5} parent=5 // pred_check
      _
    $region10: #{network_block_forward.5} parent=5 // pred_check_branch
      %116 = sbr.rel (%p113) target = $region12
    $region11: #{network_block_forward.5} parent=5 // pred_region
      %s117 = ssub.s32 %s9, 1
      // Predicated region
      $region13: #{network_block_forward.5} parent=11 // pred_check
        %p118 = pneg %p56
      $region14: #{network_block_forward.5} parent=11 // pred_check_branch
        %120 = sbr.rel (%p118) target = $region16
      $region15: #{network_block_forward.5} parent=11 // pred_region
        _
      $region16: #{network_block_forward.5} parent=11 // pred_fallthru
        _
      // Predicated region
      $region17: #{network_block_forward.5} parent=11 // pred_check
        %p121 = pneg %p77
      $region18: #{network_block_forward.5} parent=11 // pred_check_branch
        %123 = sbr.rel (%p121) target = $region20
      $region19: #{network_block_forward.5} parent=11 // pred_region
        _
      $region20: #{network_block_forward.5} parent=11 // pred_fallthru
        _
    $region12: #{network_block_forward.5} parent=5 // pred_fallthru
      _
    %p124 = scmp.lt.s32.totalorder %s9, 2
    // Predicated region
    $region21: #{network_block_forward.5} parent=5 // pred_check
      %p125 = pneg %p124
    $region22: #{network_block_forward.5} parent=5 // pred_check_branch
      %127 = sbr.rel (%p125) target = $region24
    $region23: #{network_block_forward.5} parent=5 // pred_region
      // Predicated region
      $region25: #{network_block_forward.5} parent=23 // pred_check
        %p128 = pneg %p29
      $region26: #{network_block_forward.5} parent=23 // pred_check_branch
        %130 = sbr.rel (%p128) target = $region28
      $region27: #{network_block_forward.5} parent=23 // pred_region
        %s131 = smul.u32 2, %s9
        %p132 = scmp.lt.s32.totalorder %s131, 3
        %s133 = scalar_select %p132, %s131, 3
        %s134 = smul.addr %s133, 8
        %s135 = scalar_lea.vmem %s0, %s134
        %s136 = smul.u32 2, %s9
      $region28: #{network_block_forward.5} parent=23 // pred_fallthru
        _
    $region24: #{network_block_forward.5} parent=5 // pred_fallthru
      _
    %p137 = scmp.le.s32.totalorder 1, %s9
    %p138 = scmp.lt.s32.totalorder %s9, 3
    %p139 = pnand %p137, %p138
    %p140 = pneg %p139
    // Predicated region
    $region29: #{network_block_forward.5} parent=5 // pred_check
      _
    $region30: #{network_block_forward.5} parent=5 // pred_check_branch
      %142 = sbr.rel (%p139) target = $region32
    $region31: #{network_block_forward.5} parent=5 // pred_region
      %s143 = ssub.s32 %s9, 1
      %s144 = smul.u32 2, %s14
      %p145 = scmp.lt.s32.totalorder %s144, 3
      %s146 = scalar_select %p145, %s144, 3
      %s147 = smul.addr %s146, 8
      %s148 = scalar_lea.vmem %s0, %s147
      %p149 = pneg %p35
      %p150 = pneg %p32
      %p151 = pneg %p56
      %p152 = pneg %p53
      %p153 = pneg %p77
      %p154 = pneg %p74
      %p155 = pneg %p103
      %p156 = pneg %p100
      %s157 = smul.u32 2, %s14
      %p158 = scmp.lt.s32.totalorder %s157, 3
      %s159 = scalar_select %p158, %s157, 3
      %s160 = smul.addr %s159, 4
      %s161 = scalar_lea.vmem %s3, %s160
      %s162 = smul.u32 2, %s14
      %p163 = scmp.lt.s32.totalorder %s162, 3
      %s164 = scalar_select %p163, %s162, 3
      %s165 = smul.addr %s164, 8
      %s166 = scalar_lea.vmem %s0, %s165
      %s167 = smul.u32 2, %s14
      %s168 = smul.u32 2, %s14
      %p169 = scmp.lt.s32.totalorder %s168, 3
      %s170 = scalar_select %p169, %s168, 3
      %s171 = smul.addr %s170, 4
      %s172 = scalar_lea.vmem %s3, %s171
      %s173 = smul.u32 2, %s14
      %v174 = vld [vmem:[%s166] sm:$0xff]
      %v175 = vld [vmem:[%s166 + $0x8] sm:$0xff]
      %v176 = vld [vmem:[%s1] sm:$0x1]
      %v178 = vlaneseq
      %v179 = vshrl.u32 %v178, 7
      %v180 = vsub.s32 0, %v179
      %v181 = vrot.slane %v176, %v180
      %v183 = vmul.f32 %v174, %v181
      %v184 = vmul.f32 %v175, %v181
      %v185 = vld [vmem:[%s2] sm:$0x1]
      %v187 = vlaneseq
      %v188 = vshrl.u32 %v187, 7
      %v189 = vsub.s32 0, %v188
      %v190 = vrot.slane %v185, %v189
      %v192 = vadd.f32 %v183, %v190
      %v193 = vadd.f32 %v184, %v190
      %v194 = vmax.f32 %v192, 0.0
      %v195 = vmax.f32 %v193, 0.0
      %v196 = vpack.c.bf16 %v195, %v194
      %v198 = vunpack.c.l.b16 %v196
      %v199 = vunpack.c.h.b16 %v196
      %v200 = vpack.c.b16 %v198, %v198
      %v201 = vpack.c.b16 %v199, %v199
      %204 = vst [vmem:[%s172] sm:$0xf] %v200
      %205 = vst [vmem:[%s172 + $0x4] sm:$0xf] %v201
      %s206 = smul.u32 2, %s14
      %p207 = scmp.lt.s32.totalorder %s206, 3
      %s208 = scalar_select %p207, %s206, 3
      %s209 = smul.addr %s208, 4
      %s210 = scalar_lea.vmem %s3, %s209
      // Predicated region
      $region33: #{network_block_forward.5} parent=31 // pred_check
        %p211 = pneg %p100
      $region34: #{network_block_forward.5} parent=31 // pred_check_branch
        %213 = sbr.rel (%p211) target = $region36
      $region35: #{network_block_forward.5} parent=31 // pred_region
        %s214 = smul.u32 2, %s14
      $region36: #{network_block_forward.5} parent=31 // pred_fallthru
        _
    $region32: #{network_block_forward.5} parent=5 // pred_fallthru
      _
    %p215 = scmp.le.s32.totalorder 2, %s9
    // Predicated region
    $region37: #{network_block_forward.5} parent=5 // pred_check
      %p216 = pneg %p215
    $region38: #{network_block_forward.5} parent=5 // pred_check_branch
      %218 = sbr.rel (%p216) target = $region40
    $region39: #{network_block_forward.5} parent=5 // pred_region
      %s219 = ssub.s32 %s9, 2
      // Predicated region
      $region41: #{network_block_forward.5} parent=39 // pred_check
        %p220 = pneg %p106
      $region42: #{network_block_forward.5} parent=39 // pred_check_branch
        %222 = sbr.rel (%p220) target = $region44
      $region43: #{network_block_forward.5} parent=39 // pred_region
        %s223 = smul.u32 2, %s15
        %p224 = scmp.lt.s32.totalorder %s223, 3
        %s225 = scalar_select %p224, %s223, 3
        %s226 = smul.addr %s225, 4
        %s227 = scalar_lea.vmem %s3, %s226
      $region44: #{network_block_forward.5} parent=39 // pred_fallthru
        _
    $region40: #{network_block_forward.5} parent=5 // pred_fallthru
      _
  $region6: #{network_block_forward.5} parent=0 // loop_footer
    %s13 = sadd.s32 1, %s9
  $region7: #{network_block_forward.5} parent=0 // loop_footer_branch
    %8 = sbr.rel target = $region3
  $region8: #{network_block_forward.5} parent=0 // loop_exit
    _

// kernel: network_block_forward.6
$region0: #{network_block_forward.6}
  #allocation0 [shape = 'u32[]', space=smem, size = 0x4, offset = 0x4, fixed_abs, tag = 'smem constant byte address 0x4 - core index']
  #allocation1 [shape = 'u32[144,128]{1,0:T(1,128)}', space=vmem, size = 0x12000, scoped, tag = 'internal scratch']
  %s0 = inlined_call_operand.vmem [shape: bf16[128,72], index: 0, kind: input, shape index: {}]
  %s1 = inlined_call_operand.vmem [shape: bf16[72,32], index: 1, kind: input, shape index: {}]
  %s2 = inlined_call_operand.vmem [shape: f32[1,32], index: 2, kind: input, shape index: {}]
  %s3 = inlined_call_operand.vmem [shape: f32[1,32], index: 3, kind: input, shape index: {}]
  %s4 = inlined_call_operand.vmem [shape: f32[1,32], index: 4, kind: input, shape index: {}]
  %s5 = inlined_call_operand.vmem [shape: bf16[128,32], index: 5, kind: output, shape index: {}]
  %s6 = sld [smem:[#allocation0]]
  $region53: #{network_block_forward.6} parent=0
    _
  %s8 = ssub.s32 1, %s6
  %s9 = scalar_select 0, %s8, %s6
  loop: start=0, step=1, limit=4
  $region2: #{network_block_forward.6} parent=0 // loop_pre_header
    _
  $region3: #{network_block_forward.6} parent=0 // loop_header
    %s11 = sphi 0, %s15
    %p12 = scmp.ge.s32.totalorder %s11, 4
    %s21 = sphi 0, %s23
    %s24 = sphi 0, %s21
    %s25 = sphi 0, %s24
    %s41 = sphi 0, %s25
    %s45 = sphi 0, %s45
    %s47 = sphi 0, %s45
    %s48 = sphi 0, %s47
    %s62 = sphi 0, %s48
    %s66 = sphi 0, %s66
    %s68 = sphi 0, %s66
    %s69 = sphi 0, %s68
    %s83 = sphi 0, %s69
    %s87 = sphi 0, %s87
    %s89 = sphi 0, %s87
    %s90 = sphi 0, %s89
    %s104 = sphi 0, %s90
    %s108 = sphi 0, %s108
    %s110 = sphi 0, %s108
    %s111 = sphi 0, %s110
    %s125 = sphi 0, %s111
    %s131 = sphi 0, %s133
    %s134 = sphi 0, %s131
    %s135 = sphi 0, %s134
    %s151 = sphi 0, %s135
  $region4: #{network_block_forward.6} parent=0 // loop_header_branch
    %14 = sbr.rel (%p12) target = $region8
  $region5: #{network_block_forward.6} parent=0 // loop_body
    %s16 = ssub.s32 %s11, 1
    %s17 = ssub.s32 %s11, 2
    %s18 = sadd.s32 %s11, 1
    %s19 = ssub.s32 %s11, %s18
    %p20 = scmp.eq.s32.totalorder %s19, 0
    %s22 = sadd.s32 %s21, 1
    %s23 = scalar_select %p20, %s21, %s22
    %p26 = pneg %p20
    %p27 = scmp.eq.s32.totalorder %s11, 1
    %p28 = por %p26, %p27
    %p29 = scmp.ne.s32.totalorder %s21, %s24
    %p30 = scmp.eq.s32.totalorder %s11, 0
    %p31 = por %p29, %p30
    %p32 = scmp.ne.s32.totalorder %s21, %s24
    %p33 = scmp.eq.s32.totalorder %s16, 1
    %p34 = por %p32, %p33
    %p35 = scmp.ne.s32.totalorder %s24, %s25
    %p36 = scmp.eq.s32.totalorder %s16, 0
    %p37 = por %p35, %p36
    %p38 = scmp.ne.s32.totalorder %s24, %s25
    %p39 = scmp.eq.s32.totalorder %s17, 1
    %p40 = por %p38, %p39
    %p42 = scmp.ne.s32.totalorder %s25, %s41
    %p43 = scmp.eq.s32.totalorder %s17, 0
    %p44 = por %p42, %p43
    %s46 = sadd.s32 %s45, 1
    %p49 = scmp.eq.s32.totalorder %s11, 1
    %p50 = scmp.ne.s32.totalorder %s45, %s47
    %p51 = scmp.eq.s32.totalorder %s11, 0
    %p52 = por %p50, %p51
    %p53 = scmp.ne.s32.totalorder %s45, %s47
    %p54 = scmp.eq.s32.totalorder %s16, 1
    %p55 = por %p53, %p54
    %p56 = scmp.ne.s32.totalorder %s47, %s48
    %p57 = scmp.eq.s32.totalorder %s16, 0
    %p58 = por %p56, %p57
    %p59 = scmp.ne.s32.totalorder %s47, %s48
    %p60 = scmp.eq.s32.totalorder %s17, 1
    %p61 = por %p59, %p60
    %p63 = scmp.ne.s32.totalorder %s48, %s62
    %p64 = scmp.eq.s32.totalorder %s17, 0
    %p65 = por %p63, %p64
    %s67 = sadd.s32 %s66, 1
    %p70 = scmp.eq.s32.totalorder %s11, 1
    %p71 = scmp.ne.s32.totalorder %s66, %s68
    %p72 = scmp.eq.s32.totalorder %s11, 0
    %p73 = por %p71, %p72
    %p74 = scmp.ne.s32.totalorder %s66, %s68
    %p75 = scmp.eq.s32.totalorder %s16, 1
    %p76 = por %p74, %p75
    %p77 = scmp.ne.s32.totalorder %s68, %s69
    %p78 = scmp.eq.s32.totalorder %s16, 0
    %p79 = por %p77, %p78
    %p80 = scmp.ne.s32.totalorder %s68, %s69
    %p81 = scmp.eq.s32.totalorder %s17, 1
    %p82 = por %p80, %p81
    %p84 = scmp.ne.s32.totalorder %s69, %s83
    %p85 = scmp.eq.s32.totalorder %s17, 0
    %p86 = por %p84, %p85
    %s88 = sadd.s32 %s87, 1
    %p91 = scmp.eq.s32.totalorder %s11, 1
    %p92 = scmp.ne.s32.totalorder %s87, %s89
    %p93 = scmp.eq.s32.totalorder %s11, 0
    %p94 = por %p92, %p93
    %p95 = scmp.ne.s32.totalorder %s87, %s89
    %p96 = scmp.eq.s32.totalorder %s16, 1
    %p97 = por %p95, %p96
    %p98 = scmp.ne.s32.totalorder %s89, %s90
    %p99 = scmp.eq.s32.totalorder %s16, 0
    %p100 = por %p98, %p99
    %p101 = scmp.ne.s32.totalorder %s89, %s90
    %p102 = scmp.eq.s32.totalorder %s17, 1
    %p103 = por %p101, %p102
    %p105 = scmp.ne.s32.totalorder %s90, %s104
    %p106 = scmp.eq.s32.totalorder %s17, 0
    %p107 = por %p105, %p106
    %s109 = sadd.s32 %s108, 1
    %p112 = scmp.eq.s32.totalorder %s11, 1
    %p113 = scmp.ne.s32.totalorder %s108, %s110
    %p114 = scmp.eq.s32.totalorder %s11, 0
    %p115 = por %p113, %p114
    %p116 = scmp.ne.s32.totalorder %s108, %s110
    %p117 = scmp.eq.s32.totalorder %s16, 1
    %p118 = por %p116, %p117
    %p119 = scmp.ne.s32.totalorder %s110, %s111
    %p120 = scmp.eq.s32.totalorder %s16, 0
    %p121 = por %p119, %p120
    %p122 = scmp.ne.s32.totalorder %s110, %s111
    %p123 = scmp.eq.s32.totalorder %s17, 1
    %p124 = por %p122, %p123
    %p126 = scmp.ne.s32.totalorder %s111, %s125
    %p127 = scmp.eq.s32.totalorder %s17, 0
    %p128 = por %p126, %p127
    %s129 = ssub.s32 %s11, %s18
    %p130 = scmp.eq.s32.totalorder %s129, 0
    %s132 = sadd.s32 %s131, 1
    %s133 = scalar_select %p130, %s131, %s132
    %p136 = pneg %p130
    %p137 = scmp.eq.s32.totalorder %s11, 1
    %p138 = por %p136, %p137
    %p139 = scmp.ne.s32.totalorder %s131, %s134
    %p140 = scmp.eq.s32.totalorder %s11, 0
    %p141 = por %p139, %p140
    %p142 = scmp.ne.s32.totalorder %s131, %s134
    %p143 = scmp.eq.s32.totalorder %s16, 1
    %p144 = por %p142, %p143
    %p145 = scmp.ne.s32.totalorder %s134, %s135
    %p146 = scmp.eq.s32.totalorder %s16, 0
    %p147 = por %p145, %p146
    %p148 = scmp.ne.s32.totalorder %s134, %s135
    %p149 = scmp.eq.s32.totalorder %s17, 1
    %p150 = por %p148, %p149
    %p152 = scmp.ne.s32.totalorder %s135, %s151
    %p153 = scmp.eq.s32.totalorder %s17, 0
    %p154 = por %p152, %p153
    %p155 = scmp.le.s32.totalorder 1, %s11
    %p156 = scmp.lt.s32.totalorder %s11, 3
    %p157 = pnand %p155, %p156
    %p158 = pneg %p157
    // Predicated region
    $region9: #{network_block_forward.6} parent=5 // pred_check
      _
    $region10: #{network_block_forward.6} parent=5 // pred_check_branch
      %160 = sbr.rel (%p157) target = $region12
    $region11: #{network_block_forward.6} parent=5 // pred_region
      %s161 = ssub.s32 %s11, 1
      // Predicated region
      $region13: #{network_block_forward.6} parent=11 // pred_check
        %p162 = pneg %p58
      $region14: #{network_block_forward.6} parent=11 // pred_check_branch
        %164 = sbr.rel (%p162) target = $region16
      $region15: #{network_block_forward.6} parent=11 // pred_region
        _
      $region16: #{network_block_forward.6} parent=11 // pred_fallthru
        _
      // Predicated region
      $region17: #{network_block_forward.6} parent=11 // pred_check
        %p165 = pneg %p79
      $region18: #{network_block_forward.6} parent=11 // pred_check_branch
        %167 = sbr.rel (%p165) target = $region20
      $region19: #{network_block_forward.6} parent=11 // pred_region
        _
      $region20: #{network_block_forward.6} parent=11 // pred_fallthru
        _
      // Predicated region
      $region21: #{network_block_forward.6} parent=11 // pred_check
        %p168 = pneg %p100
      $region22: #{network_block_forward.6} parent=11 // pred_check_branch
        %170 = sbr.rel (%p168) target = $region24
      $region23: #{network_block_forward.6} parent=11 // pred_region
        _
      $region24: #{network_block_forward.6} parent=11 // pred_fallthru
        _
      // Predicated region
      $region25: #{network_block_forward.6} parent=11 // pred_check
        %p171 = pneg %p121
      $region26: #{network_block_forward.6} parent=11 // pred_check_branch
        %173 = sbr.rel (%p171) target = $region28
      $region27: #{network_block_forward.6} parent=11 // pred_region
        _
      $region28: #{network_block_forward.6} parent=11 // pred_fallthru
        _
    $region12: #{network_block_forward.6} parent=5 // pred_fallthru
      _
    %p174 = scmp.lt.s32.totalorder %s11, 2
    // Predicated region
    $region29: #{network_block_forward.6} parent=5 // pred_check
      %p175 = pneg %p174
    $region30: #{network_block_forward.6} parent=5 // pred_check_branch
      %177 = sbr.rel (%p175) target = $region32
    $region31: #{network_block_forward.6} parent=5 // pred_region
      // Predicated region
      $region33: #{network_block_forward.6} parent=31 // pred_check
        %p178 = pneg %p31
      $region34: #{network_block_forward.6} parent=31 // pred_check_branch
        %180 = sbr.rel (%p178) target = $region36
      $region35: #{network_block_forward.6} parent=31 // pred_region
        %s181 = smul.u32 8, %s11
        %p182 = scmp.lt.s32.totalorder %s181, 15
        %s183 = scalar_select %p182, %s181, 15
        %s184 = smul.addr %s183, 4
        %s185 = scalar_lea.vmem %s0, %s184
        %s186 = smul.u32 8, %s11
      $region36: #{network_block_forward.6} parent=31 // pred_fallthru
        _
    $region32: #{network_block_forward.6} parent=5 // pred_fallthru
      _
    %p187 = scmp.le.s32.totalorder 1, %s11
    %p188 = scmp.lt.s32.totalorder %s11, 3
    %p189 = pnand %p187, %p188
    %p190 = pneg %p189
    // Predicated region
    $region37: #{network_block_forward.6} parent=5 // pred_check
      _
    $region38: #{network_block_forward.6} parent=5 // pred_check_branch
      %192 = sbr.rel (%p189) target = $region40
    $region39: #{network_block_forward.6} parent=5 // pred_region
      %s193 = ssub.s32 %s11, 1
      %s194 = smul.u32 8, %s16
      %p195 = scmp.lt.s32.totalorder %s194, 15
      %s196 = scalar_select %p195, %s194, 15
      %s197 = smul.addr %s196, 4
      %s198 = scalar_lea.vmem %s0, %s197
      %p199 = pneg %p37
      %p200 = pneg %p34
      %p201 = pneg %p58
      %p202 = pneg %p55
      %p203 = pneg %p79
      %p204 = pneg %p76
      %p205 = pneg %p100
      %p206 = pneg %p97
      %p207 = pneg %p121
      %p208 = pneg %p118
      %p209 = pneg %p147
      %p210 = pneg %p144
      %s211 = smul.u32 8, %s16
      %p212 = scmp.lt.s32.totalorder %s211, 15
      %s213 = scalar_select %p212, %s211, 15
      %s214 = smul.addr %s213, 4
      %s215 = scalar_lea.vmem %s5, %s214
      %s216 = smul.u32 8, %s16
      %p217 = scmp.lt.s32.totalorder %s216, 15
      %s218 = scalar_select %p217, %s216, 15
      %s219 = smul.addr %s218, 4
      %s220 = scalar_lea.vmem %s0, %s219
      %s221 = smul.u32 8, %s16
      %s222 = smul.u32 8, %s16
      %p223 = scmp.lt.s32.totalorder %s222, 15
      %s224 = scalar_select %p223, %s222, 15
      %s225 = smul.addr %s224, 4
      %s226 = scalar_lea.vmem %s5, %s225
      %s227 = smul.u32 8, %s16
      %v229 = vld [vmem:[%s220] sm:$0xf]
      %v230 = vld [vmem:[%s220 + $0x4] sm:$0xf]
      %v231 = vld [vmem:[%s220 + $0x8] sm:$0xf]
      %v232 = vld [vmem:[%s220 + $0xc] sm:$0xf]
      %v233 = vld [vmem:[%s220 + $0x10] sm:$0xf]
      %v234 = vld [vmem:[%s220 + $0x14] sm:$0xf]
      %v235 = vld [vmem:[%s220 + $0x18] sm:$0xf]
      %v236 = vld [vmem:[%s220 + $0x1c] sm:$0xf]
      %v237 = vld [vmem:[%s1] sm:$0xf]
      %v238 = vld [vmem:[%s1 + $0x4] sm:$0xf]
      %v239 = vld [vmem:[%s1 + $0x8] sm:$0xf]
      %v240 = vld [vmem:[%s1 + $0xc] sm:$0xf]
      %v241 = vld [vmem:[%s1 + $0x10] sm:$0xf]
      %v242 = vld [vmem:[%s1 + $0x14] sm:$0xf]
      %v243 = vld [vmem:[%s1 + $0x18] sm:$0xf]
      %v244 = vld [vmem:[%s1 + $0x1c] sm:$0xf]
      %v245 = vld [vmem:[%s1 + $0x20] sm:$0xf]
      %v254 = vunpack.c.l.b16 %v229
      %v255 = vunpack.c.l.b16 %v230
      %v256 = vunpack.c.l.b16 %v231
      %v257 = vunpack.c.l.b16 %v232
      %v258 = vunpack.c.l.b16 %v233
      %v259 = vunpack.c.l.b16 %v234
      %v260 = vunpack.c.l.b16 %v235
      %v261 = vunpack.c.l.b16 %v236
      %v262 = vpack.c.b16 %v255, %v254
      %v263 = vpack.c.b16 %v257, %v256
      %v264 = vpack.c.b16 %v259, %v258
      %v265 = vpack.c.b16 %v261, %v260
      %v275 = vunpack.c.l.b16 %v237
      %v276 = vunpack.c.l.b16 %v238
      %v277 = vunpack.c.l.b16 %v239
      %v278 = vunpack.c.l.b16 %v240
      %v279 = vunpack.c.l.b16 %v241
      %v280 = vunpack.c.l.b16 %v242
      %v281 = vunpack.c.l.b16 %v243
      %v282 = vunpack.c.l.b16 %v244
      %v283 = vunpack.c.l.b16 %v245
      %v284 = vpack.c.b16 %v276, %v275
      %v285 = vpack.c.b16 %v278, %v277
      %v286 = vpack.c.b16 %v280, %v279
      %v287 = vpack.c.b16 %v282, %v281
      %v288 = vpack.c.b16 %v283, %v283
      %vm293 = vcmask 588800
      %v295 = vsel %vm293, %v262, 0
      %v298 = vsel %vm293, %v263, 0
      %v301 = vsel %vm293, %v264, 0
      %v304 = vsel %vm293, %v265, 0
      %vm306 = vcmask 1043456
      %v308 = vsel %vm306, %v288, 0
      %310 = vmatprep.subr.bf16.mxu0 0
      %311 = vmatpush1.bf16.msra.mxu0 0
      %312 = vmatprep.subr.bf16.mxu0 0
      %313 = vmatpush1.bf16.msra.mxu0 0
      %314 = vmatprep.subr.bf16.mxu0 0
      %315 = vmatpush1.bf16.msra.mxu0 0
      %316 = vmatprep.subr.bf16.mxu0 0
      %317 = vmatpush1.bf16.msra.mxu0 %v308
      %318 = vmatprep.subr.bf16.mxu0 0
      %319 = vmatpush1.bf16.msra.mxu0 %v287
      %320 = vmatprep.subr.bf16.mxu0 0
      %321 = vmatpush1.bf16.msra.mxu0 %v286
      %322 = vmatprep.subr.bf16.mxu0 0
      %323 = vmatpush1.bf16.msra.mxu0 %v285
      %324 = vmatprep.subr.bf16.mxu0 0
      %325 = vmatpush1.bf16.msra.mxu0 %v284
      %326 = vmatprep.subr.bf16.mxu0 0
      %327 = vmatpush2.bf16.msra.mxu0 0
      %328 = vmatprep.subr.bf16.mxu0 0
      %329 = vmatpush2.bf16.msra.mxu0 0
      %330 = vmatprep.subr.bf16.mxu0 0
      %331 = vmatpush2.bf16.msra.mxu0 0
      %332 = vmatprep.subr.bf16.mxu0 0
      %333 = vmatpush2.bf16.msra.mxu0 0
      %334 = vmatprep.subr.bf16.mxu0 0
      %335 = vmatpush2.bf16.msra.mxu0 0
      %336 = vmatprep.subr.bf16.mxu0 0
      %337 = vmatpush2.bf16.msra.mxu0 0
      %338 = vmatprep.subr.bf16.mxu0 0
      %339 = vmatpush2.bf16.msra.mxu0 0
      %340 = vmatprep.subr.bf16.mxu0 0
      %341 = vmatpush2.bf16.msra.mxu0 0
      %342 = vmatprep.mubr.bf16.mxu0 0
      %343 = vmatmul.mubr.bf16.gmra.mxu0 %v295
      %v344 = vpop.f32.mrf.mxu0
      %v345 = vadd.f32 0.0, %v344
      %v346 = vpop.f32.mrf.mxu0
      %v347 = vpop.f32.mrf.mxu0
      %v348 = vadd.f32 0.0, %v347
      %v349 = vpop.f32.mrf.mxu0
      %350 = vmatprep.mubr.bf16.mxu0 0
      %351 = vmatmul.mubr.bf16.gmra.mxu0 %v298
      %v352 = vpop.f32.mrf.mxu0
      %v353 = vadd.f32 0.0, %v352
      %v354 = vpop.f32.mrf.mxu0
      %v355 = vpop.f32.mrf.mxu0
      %v356 = vadd.f32 0.0, %v355
      %v357 = vpop.f32.mrf.mxu0
      %358 = vmatprep.mubr.bf16.mxu0 0
      %359 = vmatmul.mubr.bf16.gmra.mxu0 %v301
      %v360 = vpop.f32.mrf.mxu0
      %v361 = vadd.f32 0.0, %v360
      %v362 = vpop.f32.mrf.mxu0
      %v363 = vpop.f32.mrf.mxu0
      %v364 = vadd.f32 0.0, %v363
      %v365 = vpop.f32.mrf.mxu0
      %366 = vmatprep.mubr.bf16.mxu0 0
      %367 = vmatmul.mubr.bf16.gmra.mxu0 %v304
      %v368 = vpop.f32.mrf.mxu0
      %v369 = vadd.f32 0.0, %v368
      %v370 = vpop.f32.mrf.mxu0
      %v371 = vpop.f32.mrf.mxu0
      %v372 = vadd.f32 0.0, %v371
      %v373 = vpop.f32.mrf.mxu0
      %374 = vdwg.mxu0
      %v375 = vld [vmem:[%s2] sm:$0x1]
      %v377 = vlaneseq
      %v378 = vshrl.u32 %v377, 7
      %v379 = vsub.s32 0, %v378
      %v380 = vrot.slane %v375, %v379
      %v382 = vmul.f32 %v345, %v380
      %v383 = vmul.f32 %v348, %v380
      %v384 = vmul.f32 %v353, %v380
      %v385 = vmul.f32 %v356, %v380
      %v386 = vmul.f32 %v361, %v380
      %v387 = vmul.f32 %v364, %v380
      %v388 = vmul.f32 %v369, %v380
      %v389 = vmul.f32 %v372, %v380
      %v390 = vld [vmem:[%s3] sm:$0x1]
      %v392 = vlaneseq
      %v393 = vshrl.u32 %v392, 7
      %v394 = vsub.s32 0, %v393
      %v395 = vrot.slane %v390, %v394
      %v397 = vadd.f32 %v382, %v395
      %v398 = vadd.f32 %v383, %v395
      %v399 = vadd.f32 %v384, %v395
      %v400 = vadd.f32 %v385, %v395
      %v401 = vadd.f32 %v386, %v395
      %v402 = vadd.f32 %v387, %v395
      %v403 = vadd.f32 %v388, %v395
      %v404 = vadd.f32 %v389, %v395
      %v405 = vld [vmem:[%s4] sm:$0x1]
      %vm406 = vcmp.gt.f32.partialorder %v405, 0.0
      %v407 = vmax.f32 %v397, 0.0
      %v408 = vmax.f32 %v398, 0.0
      %v409 = vmax.f32 %v399, 0.0
      %v410 = vmax.f32 %v400, 0.0
      %v411 = vmax.f32 %v401, 0.0
      %v412 = vmax.f32 %v402, 0.0
      %v413 = vmax.f32 %v403, 0.0
      %v414 = vmax.f32 %v404, 0.0
      %v415 = vsel %vm406, 1, 0
      %v416 = vlaneseq
      %v417 = vshrl.u32 %v416, 7
      %v418 = vsub.s32 0, %v417
      %v419 = vrot.slane %v415, %v418
      %vm420 = vcmp.eq.s32.totalorder %v419, 1
      %v421 = vsel %vm420, %v407, %v397
      %v422 = vsel %vm420, %v408, %v398
      %v423 = vsel %vm420, %v409, %v399
      %v424 = vsel %vm420, %v410, %v400
      %v425 = vsel %vm420, %v411, %v401
      %v426 = vsel %vm420, %v412, %v402
      %v427 = vsel %vm420, %v413, %v403
      %v428 = vsel %vm420, %v414, %v404
      %v429 = vpack.c.bf16 %v422, %v421
      %v430 = vpack.c.bf16 %v424, %v423
      %v431 = vpack.c.bf16 %v426, %v425
      %v432 = vpack.c.bf16 %v428, %v427
      %v437 = vunpack.c.l.b16 %v429
      %v438 = vunpack.c.h.b16 %v429
      %v439 = vunpack.c.l.b16 %v430
      %v440 = vunpack.c.h.b16 %v430
      %v441 = vunpack.c.l.b16 %v431
      %v442 = vunpack.c.h.b16 %v431
      %v443 = vunpack.c.l.b16 %v432
      %v444 = vunpack.c.h.b16 %v432
      %v445 = vpack.c.b16 %v437, %v437
      %v446 = vpack.c.b16 %v438, %v438
      %v447 = vpack.c.b16 %v439, %v439
      %v448 = vpack.c.b16 %v440, %v440
      %v449 = vpack.c.b16 %v441, %v441
      %v450 = vpack.c.b16 %v442, %v442
      %v451 = vpack.c.b16 %v443, %v443
      %v452 = vpack.c.b16 %v444, %v444
      %vm461 = vcmask 257024
      %462 = vst.msk [vmem:[%s226] sm:$0xf] %vm461, %v445
      %463 = vst.msk [vmem:[%s226 + $0x4] sm:$0xf] %vm461, %v446
      %464 = vst.msk [vmem:[%s226 + $0x8] sm:$0xf] %vm461, %v447
      %465 = vst.msk [vmem:[%s226 + $0xc] sm:$0xf] %vm461, %v448
      %466 = vst.msk [vmem:[%s226 + $0x10] sm:$0xf] %vm461, %v449
      %467 = vst.msk [vmem:[%s226 + $0x14] sm:$0xf] %vm461, %v450
      %468 = vst.msk [vmem:[%s226 + $0x18] sm:$0xf] %vm461, %v451
      %469 = vst.msk [vmem:[%s226 + $0x1c] sm:$0xf] %vm461, %v452
      %s470 = smul.u32 8, %s16
      %p471 = scmp.lt.s32.totalorder %s470, 15
      %s472 = scalar_select %p471, %s470, 15
      %s473 = smul.addr %s472, 4
      %s474 = scalar_lea.vmem %s5, %s473
      // Predicated region
      $region41: #{network_block_forward.6} parent=39 // pred_check
        %p475 = pneg %p144
      $region42: #{network_block_forward.6} parent=39 // pred_check_branch
        %477 = sbr.rel (%p475) target = $region44
      $region43: #{network_block_forward.6} parent=39 // pred_region
        %s478 = smul.u32 8, %s16
      $region44: #{network_block_forward.6} parent=39 // pred_fallthru
        _
    $region40: #{network_block_forward.6} parent=5 // pred_fallthru
      _
    %p479 = scmp.le.s32.totalorder 2, %s11
    // Predicated region
    $region45: #{network_block_forward.6} parent=5 // pred_check
      %p480 = pneg %p479
    $region46: #{network_block_forward.6} parent=5 // pred_check_branch
      %482 = sbr.rel (%p480) target = $region48
    $region47: #{network_block_forward.6} parent=5 // pred_region
      %s483 = ssub.s32 %s11, 2
      // Predicated region
      $region49: #{network_block_forward.6} parent=47 // pred_check
        %p484 = pneg %p150
      $region50: #{network_block_forward.6} parent=47 // pred_check_branch
        %486 = sbr.rel (%p484) target = $region52
      $region51: #{network_block_forward.6} parent=47 // pred_region
        %s487 = smul.u32 8, %s17
        %p488 = scmp.lt.s32.totalorder %s487, 15
        %s489 = scalar_select %p488, %s487, 15
        %s490 = smul.addr %s489, 4
        %s491 = scalar_lea.vmem %s5, %s490
      $region52: #{network_block_forward.6} parent=47 // pred_fallthru
        _
    $region48: #{network_block_forward.6} parent=5 // pred_fallthru
      _
  $region6: #{network_block_forward.6} parent=0 // loop_footer
    %s15 = sadd.s32 1, %s11
  $region7: #{network_block_forward.6} parent=0 // loop_footer_branch
    %10 = sbr.rel target = $region3
  $region8: #{network_block_forward.6} parent=0 // loop_exit
    _

// kernel: network_block_forward.7
$region0: #{network_block_forward.7}
  #allocation0 [shape = 'u32[]', space=smem, size = 0x4, offset = 0x4, fixed_abs, tag = 'smem constant byte address 0x4 - core index']
  #allocation1 [shape = 'u32[144,128]{1,0:T(1,128)}', space=vmem, size = 0x12000, scoped, tag = 'internal scratch']
  %s0 = inlined_call_operand.vmem [shape: bf16[128,144], index: 0, kind: input, shape index: {}]
  %s1 = inlined_call_operand.vmem [shape: bf16[144,16], index: 1, kind: input, shape index: {}]
  %s2 = inlined_call_operand.vmem [shape: bf16[128,16], index: 2, kind: input, shape index: {}]
  %s3 = inlined_call_operand.vmem [shape: f32[1,16], index: 3, kind: input, shape index: {}]
  %s4 = inlined_call_operand.vmem [shape: f32[1,16], index: 4, kind: input, shape index: {}]
  %s5 = inlined_call_operand.vmem [shape: f32[128,16], index: 5, kind: output, shape index: {0}]
  %s6 = inlined_call_operand.vmem [shape: bf16[128,16], index: 6, kind: output, shape index: {1}]
  %7 = xla_tuple %s5, %s6
  %s8 = sld [smem:[#allocation0]]
  $region61: #{network_block_forward.7} parent=0
    _
  %s10 = ssub.s32 1, %s8
  %s11 = scalar_select 0, %s10, %s8
  loop: start=0, step=1, limit=4
  $region2: #{network_block_forward.7} parent=0 // loop_pre_header
    _
  $region3: #{network_block_forward.7} parent=0 // loop_header
    %s13 = sphi 0, %s17
    %p14 = scmp.ge.s32.totalorder %s13, 4
    %s23 = sphi 0, %s25
    %s26 = sphi 0, %s23
    %s27 = sphi 0, %s26
    %s43 = sphi 0, %s27
    %s47 = sphi 0, %s47
    %s49 = sphi 0, %s47
    %s50 = sphi 0, %s49
    %s64 = sphi 0, %s50
    %s70 = sphi 0, %s72
    %s73 = sphi 0, %s70
    %s74 = sphi 0, %s73
    %s90 = sphi 0, %s74
    %s94 = sphi 0, %s94
    %s96 = sphi 0, %s94
    %s97 = sphi 0, %s96
    %s111 = sphi 0, %s97
    %s115 = sphi 0, %s115
    %s117 = sphi 0, %s115
    %s118 = sphi 0, %s117
    %s132 = sphi 0, %s118
    %s138 = sphi 0, %s140
    %s141 = sphi 0, %s138
    %s142 = sphi 0, %s141
    %s158 = sphi 0, %s142
    %s164 = sphi 0, %s166
    %s167 = sphi 0, %s164
    %s168 = sphi 0, %s167
    %s184 = sphi 0, %s168
  $region4: #{network_block_forward.7} parent=0 // loop_header_branch
    %16 = sbr.rel (%p14) target = $region8
  $region5: #{network_block_forward.7} parent=0 // loop_body
    %s18 = ssub.s32 %s13, 1
    %s19 = ssub.s32 %s13, 2
    %s20 = sadd.s32 %s13, 1
    %s21 = ssub.s32 %s13, %s20
    %p22 = scmp.eq.s32.totalorder %s21, 0
    %s24 = sadd.s32 %s23, 1
    %s25 = scalar_select %p22, %s23, %s24
    %p28 = pneg %p22
    %p29 = scmp.eq.s32.totalorder %s13, 1
    %p30 = por %p28, %p29
    %p31 = scmp.ne.s32.totalorder %s23, %s26
    %p32 = scmp.eq.s32.totalorder %s13, 0
    %p33 = por %p31, %p32
    %p34 = scmp.ne.s32.totalorder %s23, %s26
    %p35 = scmp.eq.s32.totalorder %s18, 1
    %p36 = por %p34, %p35
    %p37 = scmp.ne.s32.totalorder %s26, %s27
    %p38 = scmp.eq.s32.totalorder %s18, 0
    %p39 = por %p37, %p38
    %p40 = scmp.ne.s32.totalorder %s26, %s27
    %p41 = scmp.eq.s32.totalorder %s19, 1
    %p42 = por %p40, %p41
    %p44 = scmp.ne.s32.totalorder %s27, %s43
    %p45 = scmp.eq.s32.totalorder %s19, 0
    %p46 = por %p44, %p45
    %s48 = sadd.s32 %s47, 1
    %p51 = scmp.eq.s32.totalorder %s13, 1
    %p52 = scmp.ne.s32.totalorder %s47, %s49
    %p53 = scmp.eq.s32.totalorder %s13, 0
    %p54 = por %p52, %p53
    %p55 = scmp.ne.s32.totalorder %s47, %s49
    %p56 = scmp.eq.s32.totalorder %s18, 1
    %p57 = por %p55, %p56
    %p58 = scmp.ne.s32.totalorder %s49, %s50
    %p59 = scmp.eq.s32.totalorder %s18, 0
    %p60 = por %p58, %p59
    %p61 = scmp.ne.s32.totalorder %s49, %s50
    %p62 = scmp.eq.s32.totalorder %s19, 1
    %p63 = por %p61, %p62
    %p65 = scmp.ne.s32.totalorder %s50, %s64
    %p66 = scmp.eq.s32.totalorder %s19, 0
    %p67 = por %p65, %p66
    %s68 = ssub.s32 %s13, %s20
    %p69 = scmp.eq.s32.totalorder %s68, 0
    %s71 = sadd.s32 %s70, 1
    %s72 = scalar_select %p69, %s70, %s71
    %p75 = pneg %p69
    %p76 = scmp.eq.s32.totalorder %s13, 1
    %p77 = por %p75, %p76
    %p78 = scmp.ne.s32.totalorder %s70, %s73
    %p79 = scmp.eq.s32.totalorder %s13, 0
    %p80 = por %p78, %p79
    %p81 = scmp.ne.s32.totalorder %s70, %s73
    %p82 = scmp.eq.s32.totalorder %s18, 1
    %p83 = por %p81, %p82
    %p84 = scmp.ne.s32.totalorder %s73, %s74
    %p85 = scmp.eq.s32.totalorder %s18, 0
    %p86 = por %p84, %p85
    %p87 = scmp.ne.s32.totalorder %s73, %s74
    %p88 = scmp.eq.s32.totalorder %s19, 1
    %p89 = por %p87, %p88
    %p91 = scmp.ne.s32.totalorder %s74, %s90
    %p92 = scmp.eq.s32.totalorder %s19, 0
    %p93 = por %p91, %p92
    %s95 = sadd.s32 %s94, 1
    %p98 = scmp.eq.s32.totalorder %s13, 1
    %p99 = scmp.ne.s32.totalorder %s94, %s96
    %p100 = scmp.eq.s32.totalorder %s13, 0
    %p101 = por %p99, %p100
    %p102 = scmp.ne.s32.totalorder %s94, %s96
    %p103 = scmp.eq.s32.totalorder %s18, 1
    %p104 = por %p102, %p103
    %p105 = scmp.ne.s32.totalorder %s96, %s97
    %p106 = scmp.eq.s32.totalorder %s18, 0
    %p107 = por %p105, %p106
    %p108 = scmp.ne.s32.totalorder %s96, %s97
    %p109 = scmp.eq.s32.totalorder %s19, 1
    %p110 = por %p108, %p109
    %p112 = scmp.ne.s32.totalorder %s97, %s111
    %p113 = scmp.eq.s32.totalorder %s19, 0
    %p114 = por %p112, %p113
    %s116 = sadd.s32 %s115, 1
    %p119 = scmp.eq.s32.totalorder %s13, 1
    %p120 = scmp.ne.s32.totalorder %s115, %s117
    %p121 = scmp.eq.s32.totalorder %s13, 0
    %p122 = por %p120, %p121
    %p123 = scmp.ne.s32.totalorder %s115, %s117
    %p124 = scmp.eq.s32.totalorder %s18, 1
    %p125 = por %p123, %p124
    %p126 = scmp.ne.s32.totalorder %s117, %s118
    %p127 = scmp.eq.s32.totalorder %s18, 0
    %p128 = por %p126, %p127
    %p129 = scmp.ne.s32.totalorder %s117, %s118
    %p130 = scmp.eq.s32.totalorder %s19, 1
    %p131 = por %p129, %p130
    %p133 = scmp.ne.s32.totalorder %s118, %s132
    %p134 = scmp.eq.s32.totalorder %s19, 0
    %p135 = por %p133, %p134
    %s136 = ssub.s32 %s13, %s20
    %p137 = scmp.eq.s32.totalorder %s136, 0
    %s139 = sadd.s32 %s138, 1
    %s140 = scalar_select %p137, %s138, %s139
    %p143 = pneg %p137
    %p144 = scmp.eq.s32.totalorder %s13, 1
    %p145 = por %p143, %p144
    %p146 = scmp.ne.s32.totalorder %s138, %s141
    %p147 = scmp.eq.s32.totalorder %s13, 0
    %p148 = por %p146, %p147
    %p149 = scmp.ne.s32.totalorder %s138, %s141
    %p150 = scmp.eq.s32.totalorder %s18, 1
    %p151 = por %p149, %p150
    %p152 = scmp.ne.s32.totalorder %s141, %s142
    %p153 = scmp.eq.s32.totalorder %s18, 0
    %p154 = por %p152, %p153
    %p155 = scmp.ne.s32.totalorder %s141, %s142
    %p156 = scmp.eq.s32.totalorder %s19, 1
    %p157 = por %p155, %p156
    %p159 = scmp.ne.s32.totalorder %s142, %s158
    %p160 = scmp.eq.s32.totalorder %s19, 0
    %p161 = por %p159, %p160
    %s162 = ssub.s32 %s13, %s20
    %p163 = scmp.eq.s32.totalorder %s162, 0
    %s165 = sadd.s32 %s164, 1
    %s166 = scalar_select %p163, %s164, %s165
    %p169 = pneg %p163
    %p170 = scmp.eq.s32.totalorder %s13, 1
    %p171 = por %p169, %p170
    %p172 = scmp.ne.s32.totalorder %s164, %s167
    %p173 = scmp.eq.s32.totalorder %s13, 0
    %p174 = por %p172, %p173
    %p175 = scmp.ne.s32.totalorder %s164, %s167
    %p176 = scmp.eq.s32.totalorder %s18, 1
    %p177 = por %p175, %p176
    %p178 = scmp.ne.s32.totalorder %s167, %s168
    %p179 = scmp.eq.s32.totalorder %s18, 0
    %p180 = por %p178, %p179
    %p181 = scmp.ne.s32.totalorder %s167, %s168
    %p182 = scmp.eq.s32.totalorder %s19, 1
    %p183 = por %p181, %p182
    %p185 = scmp.ne.s32.totalorder %s168, %s184
    %p186 = scmp.eq.s32.totalorder %s19, 0
    %p187 = por %p185, %p186
    %p188 = scmp.le.s32.totalorder 1, %s13
    %p189 = scmp.lt.s32.totalorder %s13, 3
    %p190 = pnand %p188, %p189
    %p191 = pneg %p190
    // Predicated region
    $region9: #{network_block_forward.7} parent=5 // pred_check
      _
    $region10: #{network_block_forward.7} parent=5 // pred_check_branch
      %193 = sbr.rel (%p190) target = $region12
    $region11: #{network_block_forward.7} parent=5 // pred_region
      %s194 = ssub.s32 %s13, 1
      // Predicated region
      $region13: #{network_block_forward.7} parent=11 // pred_check
        %p195 = pneg %p60
      $region14: #{network_block_forward.7} parent=11 // pred_check_branch
        %197 = sbr.rel (%p195) target = $region16
      $region15: #{network_block_forward.7} parent=11 // pred_region
        _
      $region16: #{network_block_forward.7} parent=11 // pred_fallthru
        _
      // Predicated region
      $region17: #{network_block_forward.7} parent=11 // pred_check
        %p198 = pneg %p107
      $region18: #{network_block_forward.7} parent=11 // pred_check_branch
        %200 = sbr.rel (%p198) target = $region20
      $region19: #{network_block_forward.7} parent=11 // pred_region
        _
      $region20: #{network_block_forward.7} parent=11 // pred_fallthru
        _
      // Predicated region
      $region21: #{network_block_forward.7} parent=11 // pred_check
        %p201 = pneg %p128
      $region22: #{network_block_forward.7} parent=11 // pred_check_branch
        %203 = sbr.rel (%p201) target = $region24
      $region23: #{network_block_forward.7} parent=11 // pred_region
        _
      $region24: #{network_block_forward.7} parent=11 // pred_fallthru
        _
    $region12: #{network_block_forward.7} parent=5 // pred_fallthru
      _
    %p204 = scmp.lt.s32.totalorder %s13, 2
    // Predicated region
    $region25: #{network_block_forward.7} parent=5 // pred_check
      %p205 = pneg %p204
    $region26: #{network_block_forward.7} parent=5 // pred_check_branch
      %207 = sbr.rel (%p205) target = $region28
    $region27: #{network_block_forward.7} parent=5 // pred_region
      // Predicated region
      $region29: #{network_block_forward.7} parent=27 // pred_check
        %p208 = pneg %p33
      $region30: #{network_block_forward.7} parent=27 // pred_check_branch
        %210 = sbr.rel (%p208) target = $region32
      $region31: #{network_block_forward.7} parent=27 // pred_region
        %s211 = smul.u32 8, %s13
        %p212 = scmp.lt.s32.totalorder %s211, 15
        %s213 = scalar_select %p212, %s211, 15
        %s214 = smul.addr %s213, 2
        %s215 = smul.addr %s214, 4
        %s216 = scalar_lea.vmem %s0, %s215
        %s217 = smul.u32 8, %s13
      $region32: #{network_block_forward.7} parent=27 // pred_fallthru
        _
      // Predicated region
      $region33: #{network_block_forward.7} parent=27 // pred_check
        %p218 = pneg %p80
      $region34: #{network_block_forward.7} parent=27 // pred_check_branch
        %220 = sbr.rel (%p218) target = $region36
      $region35: #{network_block_forward.7} parent=27 // pred_region
        %s221 = smul.u32 8, %s13
        %p222 = scmp.lt.s32.totalorder %s221, 15
        %s223 = scalar_select %p222, %s221, 15
        %s224 = smul.addr %s223, 4
        %s225 = scalar_lea.vmem %s2, %s224
        %s226 = smul.u32 8, %s13
      $region36: #{network_block_forward.7} parent=27 // pred_fallthru
        _
    $region28: #{network_block_forward.7} parent=5 // pred_fallthru
      _
    %p227 = scmp.le.s32.totalorder 1, %s13
    %p228 = scmp.lt.s32.totalorder %s13, 3
    %p229 = pnand %p227, %p228
    %p230 = pneg %p229
    // Predicated region
    $region37: #{network_block_forward.7} parent=5 // pred_check
      _
    $region38: #{network_block_forward.7} parent=5 // pred_check_branch
      %232 = sbr.rel (%p229) target = $region40
    $region39: #{network_block_forward.7} parent=5 // pred_region
      %s233 = ssub.s32 %s13, 1
      %s234 = smul.u32 8, %s18
      %p235 = scmp.lt.s32.totalorder %s234, 15
      %s236 = scalar_select %p235, %s234, 15
      %s237 = smul.addr %s236, 2
      %s238 = smul.addr %s237, 4
      %s239 = scalar_lea.vmem %s0, %s238
      %p240 = pneg %p39
      %p241 = pneg %p36
      %p242 = pneg %p60
      %p243 = pneg %p57
      %s244 = smul.u32 8, %s18
      %p245 = scmp.lt.s32.totalorder %s244, 15
      %s246 = scalar_select %p245, %s244, 15
      %s247 = smul.addr %s246, 4
      %s248 = scalar_lea.vmem %s2, %s247
      %p249 = pneg %p86
      %p250 = pneg %p83
      %p251 = pneg %p107
      %p252 = pneg %p104
      %p253 = pneg %p128
      %p254 = pneg %p125
      %p255 = pneg %p154
      %p256 = pneg %p151
      %s257 = smul.u32 8, %s18
      %p258 = scmp.lt.s32.totalorder %s257, 15
      %s259 = scalar_select %p258, %s257, 15
      %s260 = smul.addr %s259, 8
      %s261 = scalar_lea.vmem %s5, %s260
      %p262 = pneg %p180
      %p263 = pneg %p177
      %s264 = smul.u32 8, %s18
      %p265 = scmp.lt.s32.totalorder %s264, 15
      %s266 = scalar_select %p265, %s264, 15
      %s267 = smul.addr %s266, 4
      %s268 = scalar_lea.vmem %s6, %s267
      %s269 = smul.u32 8, %s18
      %p270 = scmp.lt.s32.totalorder %s269, 15
      %s271 = scalar_select %p270, %s269, 15
      %s272 = smul.addr %s271, 2
      %s273 = smul.addr %s272, 4
      %s274 = scalar_lea.vmem %s0, %s273
      %s275 = smul.u32 8, %s18
      %s276 = smul.u32 8, %s18
      %p277 = scmp.lt.s32.totalorder %s276, 15
      %s278 = scalar_select %p277, %s276, 15
      %s279 = smul.addr %s278, 4
      %s280 = scalar_lea.vmem %s2, %s279
      %s281 = smul.u32 8, %s18
      %s282 = smul.u32 8, %s18
      %p283 = scmp.lt.s32.totalorder %s282, 15
      %s284 = scalar_select %p283, %s282, 15
      %s285 = smul.addr %s284, 8
      %s286 = scalar_lea.vmem %s5, %s285
      %s287 = smul.u32 8, %s18
      %s288 = smul.u32 8, %s18
      %p289 = scmp.lt.s32.totalorder %s288, 15
      %s290 = scalar_select %p289, %s288, 15
      %s291 = smul.addr %s290, 4
      %s292 = scalar_lea.vmem %s6, %s291
      %s293 = smul.u32 8, %s18
      %v295 = vld [vmem:[%s274] sm:$0xff]
      %v296 = vld [vmem:[%s274 + $0x8] sm:$0xff]
      %v297 = vld [vmem:[%s274 + $0x10] sm:$0xff]
      %v298 = vld [vmem:[%s274 + $0x18] sm:$0xff]
      %v299 = vld [vmem:[%s274 + $0x20] sm:$0xff]
      %v300 = vld [vmem:[%s274 + $0x28] sm:$0xff]
      %v301 = vld [vmem:[%s274 + $0x30] sm:$0xff]
      %v302 = vld [vmem:[%s274 + $0x38] sm:$0xff]
      %v303 = vld [vmem:[%s1] sm:$0xf]
      %v304 = vld [vmem:[%s1 + $0x4] sm:$0xf]
      %v305 = vld [vmem:[%s1 + $0x8] sm:$0xf]
      %v306 = vld [vmem:[%s1 + $0xc] sm:$0xf]
      %v307 = vld [vmem:[%s1 + $0x10] sm:$0xf]
      %v308 = vld [vmem:[%s1 + $0x14] sm:$0xf]
      %v309 = vld [vmem:[%s1 + $0x18] sm:$0xf]
      %v310 = vld [vmem:[%s1 + $0x1c] sm:$0xf]
      %v311 = vld [vmem:[%s1 + $0x20] sm:$0xf]
      %v312 = vld [vmem:[%s1 + $0x24] sm:$0xf]
      %v313 = vld [vmem:[%s1 + $0x28] sm:$0xf]
      %v314 = vld [vmem:[%s1 + $0x2c] sm:$0xf]
      %v315 = vld [vmem:[%s1 + $0x30] sm:$0xf]
      %v316 = vld [vmem:[%s1 + $0x34] sm:$0xf]
      %v317 = vld [vmem:[%s1 + $0x38] sm:$0xf]
      %v318 = vld [vmem:[%s1 + $0x3c] sm:$0xf]
      %v319 = vld [vmem:[%s1 + $0x40] sm:$0xf]
      %v320 = vld [vmem:[%s1 + $0x44] sm:$0xf]
      %v321 = vld [vmem:[%s280] sm:$0xf]
      %v322 = vld [vmem:[%s280 + $0x4] sm:$0xf]
      %v323 = vld [vmem:[%s280 + $0x8] sm:$0xf]
      %v324 = vld [vmem:[%s280 + $0xc] sm:$0xf]
      %v325 = vld [vmem:[%s280 + $0x10] sm:$0xf]
      %v326 = vld [vmem:[%s280 + $0x14] sm:$0xf]
      %v327 = vld [vmem:[%s280 + $0x18] sm:$0xf]
      %v328 = vld [vmem:[%s280 + $0x1c] sm:$0xf]
      %v329 = vunpack.c.l.bf16 %v321
      %v330 = vunpack.c.l.bf16 %v322
      %v331 = vunpack.c.l.bf16 %v323
      %v332 = vunpack.c.l.bf16 %v324
      %v333 = vunpack.c.l.bf16 %v325
      %v334 = vunpack.c.l.bf16 %v326
      %v335 = vunpack.c.l.bf16 %v327
      %v336 = vunpack.c.l.bf16 %v328
      %v345 = vunpack.c.l.b16 %v295
      %v346 = vunpack.c.h.b16 %v295
      %v347 = vunpack.c.l.b16 %v296
      %v348 = vunpack.c.h.b16 %v296
      %v349 = vunpack.c.l.b16 %v297
      %v350 = vunpack.c.h.b16 %v297
      %v351 = vunpack.c.l.b16 %v298
      %v352 = vunpack.c.h.b16 %v298
      %v353 = vunpack.c.l.b16 %v299
      %v354 = vunpack.c.h.b16 %v299
      %v355 = vunpack.c.l.b16 %v300
      %v356 = vunpack.c.h.b16 %v300
      %v357 = vunpack.c.l.b16 %v301
      %v358 = vunpack.c.h.b16 %v301
      %v359 = vunpack.c.l.b16 %v302
      %v360 = vunpack.c.h.b16 %v302
      %v361 = vpack.c.b16 %v347, %v345
      %v362 = vpack.c.b16 %v348, %v346
      %v363 = vpack.c.b16 %v351, %v349
      %v364 = vpack.c.b16 %v352, %v350
      %v365 = vpack.c.b16 %v355, %v353
      %v366 = vpack.c.b16 %v356, %v354
      %v367 = vpack.c.b16 %v359, %v357
      %v368 = vpack.c.b16 %v360, %v358
      %v391 = vunpack.c.l.b16 %v303
      %v392 = vunpack.c.l.b16 %v304
      %v393 = vunpack.c.l.b16 %v305
      %v394 = vunpack.c.l.b16 %v306
      %v395 = vunpack.c.l.b16 %v307
      %v396 = vunpack.c.l.b16 %v308
      %v397 = vunpack.c.l.b16 %v309
      %v398 = vunpack.c.l.b16 %v310
      %v399 = vunpack.c.l.b16 %v311
      %v400 = vunpack.c.l.b16 %v312
      %v401 = vunpack.c.l.b16 %v313
      %v402 = vunpack.c.l.b16 %v314
      %v403 = vunpack.c.l.b16 %v315
      %v404 = vunpack.c.l.b16 %v316
      %v405 = vunpack.c.l.b16 %v317
      %v406 = vunpack.c.l.b16 %v318
      %v407 = vunpack.c.l.b16 %v319
      %v408 = vunpack.c.l.b16 %v320
      %v409 = vpack.c.b16 %v392, %v391
      %v410 = vpack.c.b16 %v394, %v393
      %v411 = vpack.c.b16 %v396, %v395
      %v412 = vpack.c.b16 %v398, %v397
      %v413 = vpack.c.b16 %v400, %v399
      %v414 = vpack.c.b16 %v402, %v401
      %v415 = vpack.c.b16 %v404, %v403
      %v416 = vpack.c.b16 %v406, %v405
      %v417 = vpack.c.b16 %v408, %v407
      %vm427 = vcmask 130048
      %v429 = vsel %vm427, %v362, 0
      %v432 = vsel %vm427, %v364, 0
      %v435 = vsel %vm427, %v366, 0
      %v438 = vsel %vm427, %v368, 0
      %440 = vmatprep.subr.bf16.mxu0 0
      %441 = vmatpush1.bf16.msra.mxu0 %v416
      %442 = vmatprep.subr.bf16.mxu0 0
      %443 = vmatpush1.bf16.msra.mxu0 %v415
      %444 = vmatprep.subr.bf16.mxu0 0
      %445 = vmatpush1.bf16.msra.mxu0 %v414
      %446 = vmatprep.subr.bf16.mxu0 0
      %447 = vmatpush1.bf16.msra.mxu0 %v413
      %448 = vmatprep.subr.bf16.mxu0 0
      %449 = vmatpush1.bf16.msra.mxu0 %v412
      %450 = vmatprep.subr.bf16.mxu0 0
      %451 = vmatpush1.bf16.msra.mxu0 %v411
      %452 = vmatprep.subr.bf16.mxu0 0
      %453 = vmatpush1.bf16.msra.mxu0 %v410
      %454 = vmatprep.subr.bf16.mxu0 0
      %455 = vmatpush1.bf16.msra.mxu0 %v409
      %456 = vmatprep.subr.bf16.mxu0 0
      %457 = vmatpush2.bf16.msra.mxu0 0
      %458 = vmatprep.subr.bf16.mxu0 0
      %459 = vmatpush2.bf16.msra.mxu0 0
      %460 = vmatprep.subr.bf16.mxu0 0
      %461 = vmatpush2.bf16.msra.mxu0 0
      %462 = vmatprep.subr.bf16.mxu0 0
      %463 = vmatpush2.bf16.msra.mxu0 0
      %464 = vmatprep.subr.bf16.mxu0 0
      %465 = vmatpush2.bf16.msra.mxu0 0
      %466 = vmatprep.subr.bf16.mxu0 0
      %467 = vmatpush2.bf16.msra.mxu0 0
      %468 = vmatprep.subr.bf16.mxu0 0
      %469 = vmatpush2.bf16.msra.mxu0 0
      %470 = vmatprep.subr.bf16.mxu0 0
      %471 = vmatpush2.bf16.msra.mxu0 %v417
      %472 = vmatprep.mubr.bf16.mxu0 %v429
      %473 = vmatmul.mubr.bf16.gmra.mxu0 %v361
      %v474 = vpop.f32.mrf.mxu0
      %v475 = vadd.f32 %v329, %v474
      %v476 = vpop.f32.mrf.mxu0
      %v477 = vpop.f32.mrf.mxu0
      %v478 = vadd.f32 %v330, %v477
      %v479 = vpop.f32.mrf.mxu0
      %480 = vmatprep.mubr.bf16.mxu0 %v432
      %481 = vmatmul.mubr.bf16.gmra.mxu0 %v363
      %v482 = vpop.f32.mrf.mxu0
      %v483 = vadd.f32 %v331, %v482
      %v484 = vpop.f32.mrf.mxu0
      %v485 = vpop.f32.mrf.mxu0
      %v486 = vadd.f32 %v332, %v485
      %v487 = vpop.f32.mrf.mxu0
      %488 = vmatprep.mubr.bf16.mxu0 %v435
      %489 = vmatmul.mubr.bf16.gmra.mxu0 %v365
      %v490 = vpop.f32.mrf.mxu0
      %v491 = vadd.f32 %v333, %v490
      %v492 = vpop.f32.mrf.mxu0
      %v493 = vpop.f32.mrf.mxu0
      %v494 = vadd.f32 %v334, %v493
      %v495 = vpop.f32.mrf.mxu0
      %496 = vmatprep.mubr.bf16.mxu0 %v438
      %497 = vmatmul.mubr.bf16.gmra.mxu0 %v367
      %v498 = vpop.f32.mrf.mxu0
      %v499 = vadd.f32 %v335, %v498
      %v500 = vpop.f32.mrf.mxu0
      %v501 = vpop.f32.mrf.mxu0
      %v502 = vadd.f32 %v336, %v501
      %v503 = vpop.f32.mrf.mxu0
      %504 = vdwg.mxu0
      %505 = vst.msk [vmem:[%s286] sm:$0xff] %vm427, %v475
      %506 = vst.msk [vmem:[%s286 + $0x8] sm:$0xff] %vm427, %v478
      %507 = vst.msk [vmem:[%s286 + $0x10] sm:$0xff] %vm427, %v483
      %508 = vst.msk [vmem:[%s286 + $0x18] sm:$0xff] %vm427, %v486
      %509 = vst.msk [vmem:[%s286 + $0x20] sm:$0xff] %vm427, %v491
      %510 = vst.msk [vmem:[%s286 + $0x28] sm:$0xff] %vm427, %v494
      %511 = vst.msk [vmem:[%s286 + $0x30] sm:$0xff] %vm427, %v499
      %512 = vst.msk [vmem:[%s286 + $0x38] sm:$0xff] %vm427, %v502
      %v513 = vld [vmem:[%s3] sm:$0x1]
      %v515 = vlaneseq
      %v516 = vshrl.u32 %v515, 7
      %v517 = vsub.s32 0, %v516
      %v518 = vrot.slane %v513, %v517
      %v520 = vmul.f32 %v475, %v518
      %v521 = vmul.f32 %v478, %v518
      %v522 = vmul.f32 %v483, %v518
      %v523 = vmul.f32 %v486, %v518
      %v524 = vmul.f32 %v491, %v518
      %v525 = vmul.f32 %v494, %v518
      %v526 = vmul.f32 %v499, %v518
      %v527 = vmul.f32 %v502, %v518
      %v528 = vld [vmem:[%s4] sm:$0x1]
      %v530 = vlaneseq
      %v531 = vshrl.u32 %v530, 7
      %v532 = vsub.s32 0, %v531
      %v533 = vrot.slane %v528, %v532
      %v535 = vadd.f32 %v520, %v533
      %v536 = vadd.f32 %v521, %v533
      %v537 = vadd.f32 %v522, %v533
      %v538 = vadd.f32 %v523, %v533
      %v539 = vadd.f32 %v524, %v533
      %v540 = vadd.f32 %v525, %v533
      %v541 = vadd.f32 %v526, %v533
      %v542 = vadd.f32 %v527, %v533
      %v543 = vmax.f32 %v535, 0.0
      %v544 = vmax.f32 %v536, 0.0
      %v545 = vmax.f32 %v537, 0.0
      %v546 = vmax.f32 %v538, 0.0
      %v547 = vmax.f32 %v539, 0.0
      %v548 = vmax.f32 %v540, 0.0
      %v549 = vmax.f32 %v541, 0.0
      %v550 = vmax.f32 %v542, 0.0
      %v551 = vpack.c.bf16 %v544, %v543
      %v552 = vpack.c.bf16 %v546, %v545
      %v553 = vpack.c.bf16 %v548, %v547
      %v554 = vpack.c.bf16 %v550, %v549
      %v559 = vunpack.c.l.b16 %v551
      %v560 = vunpack.c.h.b16 %v551
      %v561 = vunpack.c.l.b16 %v552
      %v562 = vunpack.c.h.b16 %v552
      %v563 = vunpack.c.l.b16 %v553
      %v564 = vunpack.c.h.b16 %v553
      %v565 = vunpack.c.l.b16 %v554
      %v566 = vunpack.c.h.b16 %v554
      %v567 = vpack.c.b16 %v559, %v559
      %v568 = vpack.c.b16 %v560, %v560
      %v569 = vpack.c.b16 %v561, %v561
      %v570 = vpack.c.b16 %v562, %v562
      %v571 = vpack.c.b16 %v563, %v563
      %v572 = vpack.c.b16 %v564, %v564
      %v573 = vpack.c.b16 %v565, %v565
      %v574 = vpack.c.b16 %v566, %v566
      %vm583 = vcmask 125952
      %584 = vst.msk [vmem:[%s292] sm:$0xf] %vm583, %v567
      %585 = vst.msk [vmem:[%s292 + $0x4] sm:$0xf] %vm583, %v568
      %586 = vst.msk [vmem:[%s292 + $0x8] sm:$0xf] %vm583, %v569
      %587 = vst.msk [vmem:[%s292 + $0xc] sm:$0xf] %vm583, %v570
      %588 = vst.msk [vmem:[%s292 + $0x10] sm:$0xf] %vm583, %v571
      %589 = vst.msk [vmem:[%s292 + $0x14] sm:$0xf] %vm583, %v572
      %590 = vst.msk [vmem:[%s292 + $0x18] sm:$0xf] %vm583, %v573
      %591 = vst.msk [vmem:[%s292 + $0x1c] sm:$0xf] %vm583, %v574
      %s592 = smul.u32 8, %s18
      %p593 = scmp.lt.s32.totalorder %s592, 15
      %s594 = scalar_select %p593, %s592, 15
      %s595 = smul.addr %s594, 8
      %s596 = scalar_lea.vmem %s5, %s595
      %s597 = smul.u32 8, %s18
      %p598 = scmp.lt.s32.totalorder %s597, 15
      %s599 = scalar_select %p598, %s597, 15
      %s600 = smul.addr %s599, 4
      %s601 = scalar_lea.vmem %s6, %s600
      // Predicated region
      $region41: #{network_block_forward.7} parent=39 // pred_check
        %p602 = pneg %p151
      $region42: #{network_block_forward.7} parent=39 // pred_check_branch
        %604 = sbr.rel (%p602) target = $region44
      $region43: #{network_block_forward.7} parent=39 // pred_region
        %s605 = smul.u32 8, %s18
      $region44: #{network_block_forward.7} parent=39 // pred_fallthru
        _
      // Predicated region
      $region45: #{network_block_forward.7} parent=39 // pred_check
        %p606 = pneg %p177
      $region46: #{network_block_forward.7} parent=39 // pred_check_branch
        %608 = sbr.rel (%p606) target = $region48
      $region47: #{network_block_forward.7} parent=39 // pred_region
        %s609 = smul.u32 8, %s18
      $region48: #{network_block_forward.7} parent=39 // pred_fallthru
        _
    $region40: #{network_block_forward.7} parent=5 // pred_fallthru
      _
    %p610 = scmp.le.s32.totalorder 2, %s13
    // Predicated region
    $region49: #{network_block_forward.7} parent=5 // pred_check
      %p611 = pneg %p610
    $region50: #{network_block_forward.7} parent=5 // pred_check_branch
      %613 = sbr.rel (%p611) target = $region52
    $region51: #{network_block_forward.7} parent=5 // pred_region
      %s614 = ssub.s32 %s13, 2
      // Predicated region
      $region53: #{network_block_forward.7} parent=51 // pred_check
        %p615 = pneg %p157
      $region54: #{network_block_forward.7} parent=51 // pred_check_branch
        %617 = sbr.rel (%p615) target = $region56
      $region55: #{network_block_forward.7} parent=51 // pred_region
        %s618 = smul.u32 8, %s19
        %p619 = scmp.lt.s32.totalorder %s618, 15
        %s620 = scalar_select %p619, %s618, 15
        %s621 = smul.addr %s620, 8
        %s622 = scalar_lea.vmem %s5, %s621
      $region56: #{network_block_forward.7} parent=51 // pred_fallthru
        _
      // Predicated region
      $region57: #{network_block_forward.7} parent=51 // pred_check
        %p623 = pneg %p183
      $region58: #{network_block_forward.7} parent=51 // pred_check_branch
        %625 = sbr.rel (%p623) target = $region60
      $region59: #{network_block_forward.7} parent=51 // pred_region
        %s626 = smul.u32 8, %s19
        %p627 = scmp.lt.s32.totalorder %s626, 15
        %s628 = scalar_select %p627, %s626, 15
        %s629 = smul.addr %s628, 4
        %s630 = scalar_lea.vmem %s6, %s629
      $region60: #{network_block_forward.7} parent=51 // pred_fallthru
        _
    $region52: #{network_block_forward.7} parent=5 // pred_fallthru
      _
  $region6: #{network_block_forward.7} parent=0 // loop_footer
    %s17 = sadd.s32 1, %s13
  $region7: #{network_block_forward.7} parent=0 // loop_footer_branch
    %12 = sbr.rel target = $region3
  $region8: #{network_block_forward.7} parent=0 // loop_exit
    _

// kernel: network_block_forward.8
$region0: #{network_block_forward.8}
  #allocation0 [shape = 'u32[]', space=smem, size = 0x4, offset = 0x4, fixed_abs, tag = 'smem constant byte address 0x4 - core index']
  #allocation1 [shape = 'u32[144,128]{1,0:T(1,128)}', space=vmem, size = 0x12000, scoped, tag = 'internal scratch']
  %s0 = inlined_call_operand.vmem [shape: bf16[128,144], index: 0, kind: input, shape index: {}]
  %s1 = inlined_call_operand.vmem [shape: bf16[144,16], index: 1, kind: input, shape index: {}]
  %s2 = inlined_call_operand.vmem [shape: f32[1,16], index: 2, kind: input, shape index: {}]
  %s3 = inlined_call_operand.vmem [shape: f32[1,16], index: 3, kind: input, shape index: {}]
  %s4 = inlined_call_operand.vmem [shape: f32[1,16], index: 4, kind: input, shape index: {}]
  %s5 = inlined_call_operand.vmem [shape: bf16[128,16], index: 5, kind: output, shape index: {}]
  %s6 = sld [smem:[#allocation0]]
  $region53: #{network_block_forward.8} parent=0
    _
  %s8 = ssub.s32 1, %s6
  %s9 = scalar_select 0, %s8, %s6
  loop: start=0, step=1, limit=4
  $region2: #{network_block_forward.8} parent=0 // loop_pre_header
    _
  $region3: #{network_block_forward.8} parent=0 // loop_header
    %s11 = sphi 0, %s15
    %p12 = scmp.ge.s32.totalorder %s11, 4
    %s21 = sphi 0, %s23
    %s24 = sphi 0, %s21
    %s25 = sphi 0, %s24
    %s41 = sphi 0, %s25
    %s45 = sphi 0, %s45
    %s47 = sphi 0, %s45
    %s48 = sphi 0, %s47
    %s62 = sphi 0, %s48
    %s66 = sphi 0, %s66
    %s68 = sphi 0, %s66
    %s69 = sphi 0, %s68
    %s83 = sphi 0, %s69
    %s87 = sphi 0, %s87
    %s89 = sphi 0, %s87
    %s90 = sphi 0, %s89
    %s104 = sphi 0, %s90
    %s108 = sphi 0, %s108
    %s110 = sphi 0, %s108
    %s111 = sphi 0, %s110
    %s125 = sphi 0, %s111
    %s131 = sphi 0, %s133
    %s134 = sphi 0, %s131
    %s135 = sphi 0, %s134
    %s151 = sphi 0, %s135
  $region4: #{network_block_forward.8} parent=0 // loop_header_branch
    %14 = sbr.rel (%p12) target = $region8
  $region5: #{network_block_forward.8} parent=0 // loop_body
    %s16 = ssub.s32 %s11, 1
    %s17 = ssub.s32 %s11, 2
    %s18 = sadd.s32 %s11, 1
    %s19 = ssub.s32 %s11, %s18
    %p20 = scmp.eq.s32.totalorder %s19, 0
    %s22 = sadd.s32 %s21, 1
    %s23 = scalar_select %p20, %s21, %s22
    %p26 = pneg %p20
    %p27 = scmp.eq.s32.totalorder %s11, 1
    %p28 = por %p26, %p27
    %p29 = scmp.ne.s32.totalorder %s21, %s24
    %p30 = scmp.eq.s32.totalorder %s11, 0
    %p31 = por %p29, %p30
    %p32 = scmp.ne.s32.totalorder %s21, %s24
    %p33 = scmp.eq.s32.totalorder %s16, 1
    %p34 = por %p32, %p33
    %p35 = scmp.ne.s32.totalorder %s24, %s25
    %p36 = scmp.eq.s32.totalorder %s16, 0
    %p37 = por %p35, %p36
    %p38 = scmp.ne.s32.totalorder %s24, %s25
    %p39 = scmp.eq.s32.totalorder %s17, 1
    %p40 = por %p38, %p39
    %p42 = scmp.ne.s32.totalorder %s25, %s41
    %p43 = scmp.eq.s32.totalorder %s17, 0
    %p44 = por %p42, %p43
    %s46 = sadd.s32 %s45, 1
    %p49 = scmp.eq.s32.totalorder %s11, 1
    %p50 = scmp.ne.s32.totalorder %s45, %s47
    %p51 = scmp.eq.s32.totalorder %s11, 0
    %p52 = por %p50, %p51
    %p53 = scmp.ne.s32.totalorder %s45, %s47
    %p54 = scmp.eq.s32.totalorder %s16, 1
    %p55 = por %p53, %p54
    %p56 = scmp.ne.s32.totalorder %s47, %s48
    %p57 = scmp.eq.s32.totalorder %s16, 0
    %p58 = por %p56, %p57
    %p59 = scmp.ne.s32.totalorder %s47, %s48
    %p60 = scmp.eq.s32.totalorder %s17, 1
    %p61 = por %p59, %p60
    %p63 = scmp.ne.s32.totalorder %s48, %s62
    %p64 = scmp.eq.s32.totalorder %s17, 0
    %p65 = por %p63, %p64
    %s67 = sadd.s32 %s66, 1
    %p70 = scmp.eq.s32.totalorder %s11, 1
    %p71 = scmp.ne.s32.totalorder %s66, %s68
    %p72 = scmp.eq.s32.totalorder %s11, 0
    %p73 = por %p71, %p72
    %p74 = scmp.ne.s32.totalorder %s66, %s68
    %p75 = scmp.eq.s32.totalorder %s16, 1
    %p76 = por %p74, %p75
    %p77 = scmp.ne.s32.totalorder %s68, %s69
    %p78 = scmp.eq.s32.totalorder %s16, 0
    %p79 = por %p77, %p78
    %p80 = scmp.ne.s32.totalorder %s68, %s69
    %p81 = scmp.eq.s32.totalorder %s17, 1
    %p82 = por %p80, %p81
    %p84 = scmp.ne.s32.totalorder %s69, %s83
    %p85 = scmp.eq.s32.totalorder %s17, 0
    %p86 = por %p84, %p85
    %s88 = sadd.s32 %s87, 1
    %p91 = scmp.eq.s32.totalorder %s11, 1
    %p92 = scmp.ne.s32.totalorder %s87, %s89
    %p93 = scmp.eq.s32.totalorder %s11, 0
    %p94 = por %p92, %p93
    %p95 = scmp.ne.s32.totalorder %s87, %s89
    %p96 = scmp.eq.s32.totalorder %s16, 1
    %p97 = por %p95, %p96
    %p98 = scmp.ne.s32.totalorder %s89, %s90
    %p99 = scmp.eq.s32.totalorder %s16, 0
    %p100 = por %p98, %p99
    %p101 = scmp.ne.s32.totalorder %s89, %s90
    %p102 = scmp.eq.s32.totalorder %s17, 1
    %p103 = por %p101, %p102
    %p105 = scmp.ne.s32.totalorder %s90, %s104
    %p106 = scmp.eq.s32.totalorder %s17, 0
    %p107 = por %p105, %p106
    %s109 = sadd.s32 %s108, 1
    %p112 = scmp.eq.s32.totalorder %s11, 1
    %p113 = scmp.ne.s32.totalorder %s108, %s110
    %p114 = scmp.eq.s32.totalorder %s11, 0
    %p115 = por %p113, %p114
    %p116 = scmp.ne.s32.totalorder %s108, %s110
    %p117 = scmp.eq.s32.totalorder %s16, 1
    %p118 = por %p116, %p117
    %p119 = scmp.ne.s32.totalorder %s110, %s111
    %p120 = scmp.eq.s32.totalorder %s16, 0
    %p121 = por %p119, %p120
    %p122 = scmp.ne.s32.totalorder %s110, %s111
    %p123 = scmp.eq.s32.totalorder %s17, 1
    %p124 = por %p122, %p123
    %p126 = scmp.ne.s32.totalorder %s111, %s125
    %p127 = scmp.eq.s32.totalorder %s17, 0
    %p128 = por %p126, %p127
    %s129 = ssub.s32 %s11, %s18
    %p130 = scmp.eq.s32.totalorder %s129, 0
    %s132 = sadd.s32 %s131, 1
    %s133 = scalar_select %p130, %s131, %s132
    %p136 = pneg %p130
    %p137 = scmp.eq.s32.totalorder %s11, 1
    %p138 = por %p136, %p137
    %p139 = scmp.ne.s32.totalorder %s131, %s134
    %p140 = scmp.eq.s32.totalorder %s11, 0
    %p141 = por %p139, %p140
    %p142 = scmp.ne.s32.totalorder %s131, %s134
    %p143 = scmp.eq.s32.totalorder %s16, 1
    %p144 = por %p142, %p143
    %p145 = scmp.ne.s32.totalorder %s134, %s135
    %p146 = scmp.eq.s32.totalorder %s16, 0
    %p147 = por %p145, %p146
    %p148 = scmp.ne.s32.totalorder %s134, %s135
    %p149 = scmp.eq.s32.totalorder %s17, 1
    %p150 = por %p148, %p149
    %p152 = scmp.ne.s32.totalorder %s135, %s151
    %p153 = scmp.eq.s32.totalorder %s17, 0
    %p154 = por %p152, %p153
    %p155 = scmp.le.s32.totalorder 1, %s11
    %p156 = scmp.lt.s32.totalorder %s11, 3
    %p157 = pnand %p155, %p156
    %p158 = pneg %p157
    // Predicated region
    $region9: #{network_block_forward.8} parent=5 // pred_check
      _
    $region10: #{network_block_forward.8} parent=5 // pred_check_branch
      %160 = sbr.rel (%p157) target = $region12
    $region11: #{network_block_forward.8} parent=5 // pred_region
      %s161 = ssub.s32 %s11, 1
      // Predicated region
      $region13: #{network_block_forward.8} parent=11 // pred_check
        %p162 = pneg %p58
      $region14: #{network_block_forward.8} parent=11 // pred_check_branch
        %164 = sbr.rel (%p162) target = $region16
      $region15: #{network_block_forward.8} parent=11 // pred_region
        _
      $region16: #{network_block_forward.8} parent=11 // pred_fallthru
        _
      // Predicated region
      $region17: #{network_block_forward.8} parent=11 // pred_check
        %p165 = pneg %p79
      $region18: #{network_block_forward.8} parent=11 // pred_check_branch
        %167 = sbr.rel (%p165) target = $region20
      $region19: #{network_block_forward.8} parent=11 // pred_region
        _
      $region20: #{network_block_forward.8} parent=11 // pred_fallthru
        _
      // Predicated region
      $region21: #{network_block_forward.8} parent=11 // pred_check
        %p168 = pneg %p100
      $region22: #{network_block_forward.8} parent=11 // pred_check_branch
        %170 = sbr.rel (%p168) target = $region24
      $region23: #{network_block_forward.8} parent=11 // pred_region
        _
      $region24: #{network_block_forward.8} parent=11 // pred_fallthru
        _
      // Predicated region
      $region25: #{network_block_forward.8} parent=11 // pred_check
        %p171 = pneg %p121
      $region26: #{network_block_forward.8} parent=11 // pred_check_branch
        %173 = sbr.rel (%p171) target = $region28
      $region27: #{network_block_forward.8} parent=11 // pred_region
        _
      $region28: #{network_block_forward.8} parent=11 // pred_fallthru
        _
    $region12: #{network_block_forward.8} parent=5 // pred_fallthru
      _
    %p174 = scmp.lt.s32.totalorder %s11, 2
    // Predicated region
    $region29: #{network_block_forward.8} parent=5 // pred_check
      %p175 = pneg %p174
    $region30: #{network_block_forward.8} parent=5 // pred_check_branch
      %177 = sbr.rel (%p175) target = $region32
    $region31: #{network_block_forward.8} parent=5 // pred_region
      // Predicated region
      $region33: #{network_block_forward.8} parent=31 // pred_check
        %p178 = pneg %p31
      $region34: #{network_block_forward.8} parent=31 // pred_check_branch
        %180 = sbr.rel (%p178) target = $region36
      $region35: #{network_block_forward.8} parent=31 // pred_region
        %s181 = smul.u32 8, %s11
        %p182 = scmp.lt.s32.totalorder %s181, 15
        %s183 = scalar_select %p182, %s181, 15
        %s184 = smul.addr %s183, 2
        %s185 = smul.addr %s184, 4
        %s186 = scalar_lea.vmem %s0, %s185
        %s187 = smul.u32 8, %s11
      $region36: #{network_block_forward.8} parent=31 // pred_fallthru
        _
    $region32: #{network_block_forward.8} parent=5 // pred_fallthru
      _
    %p188 = scmp.le.s32.totalorder 1, %s11
    %p189 = scmp.lt.s32.totalorder %s11, 3
    %p190 = pnand %p188, %p189
    %p191 = pneg %p190
    // Predicated region
    $region37: #{network_block_forward.8} parent=5 // pred_check
      _
    $region38: #{network_block_forward.8} parent=5 // pred_check_branch
      %193 = sbr.rel (%p190) target = $region40
    $region39: #{network_block_forward.8} parent=5 // pred_region
      %s194 = ssub.s32 %s11, 1
      %s195 = smul.u32 8, %s16
      %p196 = scmp.lt.s32.totalorder %s195, 15
      %s197 = scalar_select %p196, %s195, 15
      %s198 = smul.addr %s197, 2
      %s199 = smul.addr %s198, 4
      %s200 = scalar_lea.vmem %s0, %s199
      %p201 = pneg %p37
      %p202 = pneg %p34
      %p203 = pneg %p58
      %p204 = pneg %p55
      %p205 = pneg %p79
      %p206 = pneg %p76
      %p207 = pneg %p100
      %p208 = pneg %p97
      %p209 = pneg %p121
      %p210 = pneg %p118
      %p211 = pneg %p147
      %p212 = pneg %p144
      %s213 = smul.u32 8, %s16
      %p214 = scmp.lt.s32.totalorder %s213, 15
      %s215 = scalar_select %p214, %s213, 15
      %s216 = smul.addr %s215, 4
      %s217 = scalar_lea.vmem %s5, %s216
      %s218 = smul.u32 8, %s16
      %p219 = scmp.lt.s32.totalorder %s218, 15
      %s220 = scalar_select %p219, %s218, 15
      %s221 = smul.addr %s220, 2
      %s222 = smul.addr %s221, 4
      %s223 = scalar_lea.vmem %s0, %s222
      %s224 = smul.u32 8, %s16
      %s225 = smul.u32 8, %s16
      %p226 = scmp.lt.s32.totalorder %s225, 15
      %s227 = scalar_select %p226, %s225, 15
      %s228 = smul.addr %s227, 4
      %s229 = scalar_lea.vmem %s5, %s228
      %s230 = smul.u32 8, %s16
      %v232 = vld [vmem:[%s223] sm:$0xff]
      %v233 = vld [vmem:[%s223 + $0x8] sm:$0xff]
      %v234 = vld [vmem:[%s223 + $0x10] sm:$0xff]
      %v235 = vld [vmem:[%s223 + $0x18] sm:$0xff]
      %v236 = vld [vmem:[%s223 + $0x20] sm:$0xff]
      %v237 = vld [vmem:[%s223 + $0x28] sm:$0xff]
      %v238 = vld [vmem:[%s223 + $0x30] sm:$0xff]
      %v239 = vld [vmem:[%s223 + $0x38] sm:$0xff]
      %v240 = vld [vmem:[%s1] sm:$0xf]
      %v241 = vld [vmem:[%s1 + $0x4] sm:$0xf]
      %v242 = vld [vmem:[%s1 + $0x8] sm:$0xf]
      %v243 = vld [vmem:[%s1 + $0xc] sm:$0xf]
      %v244 = vld [vmem:[%s1 + $0x10] sm:$0xf]
      %v245 = vld [vmem:[%s1 + $0x14] sm:$0xf]
      %v246 = vld [vmem:[%s1 + $0x18] sm:$0xf]
      %v247 = vld [vmem:[%s1 + $0x1c] sm:$0xf]
      %v248 = vld [vmem:[%s1 + $0x20] sm:$0xf]
      %v249 = vld [vmem:[%s1 + $0x24] sm:$0xf]
      %v250 = vld [vmem:[%s1 + $0x28] sm:$0xf]
      %v251 = vld [vmem:[%s1 + $0x2c] sm:$0xf]
      %v252 = vld [vmem:[%s1 + $0x30] sm:$0xf]
      %v253 = vld [vmem:[%s1 + $0x34] sm:$0xf]
      %v254 = vld [vmem:[%s1 + $0x38] sm:$0xf]
      %v255 = vld [vmem:[%s1 + $0x3c] sm:$0xf]
      %v256 = vld [vmem:[%s1 + $0x40] sm:$0xf]
      %v257 = vld [vmem:[%s1 + $0x44] sm:$0xf]
      %v266 = vunpack.c.l.b16 %v232
      %v267 = vunpack.c.h.b16 %v232
      %v268 = vunpack.c.l.b16 %v233
      %v269 = vunpack.c.h.b16 %v233
      %v270 = vunpack.c.l.b16 %v234
      %v271 = vunpack.c.h.b16 %v234
      %v272 = vunpack.c.l.b16 %v235
      %v273 = vunpack.c.h.b16 %v235
      %v274 = vunpack.c.l.b16 %v236
      %v275 = vunpack.c.h.b16 %v236
      %v276 = vunpack.c.l.b16 %v237
      %v277 = vunpack.c.h.b16 %v237
      %v278 = vunpack.c.l.b16 %v238
      %v279 = vunpack.c.h.b16 %v238
      %v280 = vunpack.c.l.b16 %v239
      %v281 = vunpack.c.h.b16 %v239
      %v282 = vpack.c.b16 %v268, %v266
      %v283 = vpack.c.b16 %v269, %v267
      %v284 = vpack.c.b16 %v272, %v270
      %v285 = vpack.c.b16 %v273, %v271
      %v286 = vpack.c.b16 %v276, %v274
      %v287 = vpack.c.b16 %v277, %v275
      %v288 = vpack.c.b16 %v280, %v278
      %v289 = vpack.c.b16 %v281, %v279
      %v312 = vunpack.c.l.b16 %v240
      %v313 = vunpack.c.l.b16 %v241
      %v314 = vunpack.c.l.b16 %v242
      %v315 = vunpack.c.l.b16 %v243
      %v316 = vunpack.c.l.b16 %v244
      %v317 = vunpack.c.l.b16 %v245
      %v318 = vunpack.c.l.b16 %v246
      %v319 = vunpack.c.l.b16 %v247
      %v320 = vunpack.c.l.b16 %v248
      %v321 = vunpack.c.l.b16 %v249
      %v322 = vunpack.c.l.b16 %v250
      %v323 = vunpack.c.l.b16 %v251
      %v324 = vunpack.c.l.b16 %v252
      %v325 = vunpack.c.l.b16 %v253
      %v326 = vunpack.c.l.b16 %v254
      %v327 = vunpack.c.l.b16 %v255
      %v328 = vunpack.c.l.b16 %v256
      %v329 = vunpack.c.l.b16 %v257
      %v330 = vpack.c.b16 %v313, %v312
      %v331 = vpack.c.b16 %v315, %v314
      %v332 = vpack.c.b16 %v317, %v316
      %v333 = vpack.c.b16 %v319, %v318
      %v334 = vpack.c.b16 %v321, %v320
      %v335 = vpack.c.b16 %v323, %v322
      %v336 = vpack.c.b16 %v325, %v324
      %v337 = vpack.c.b16 %v327, %v326
      %v338 = vpack.c.b16 %v329, %v328
      %vm348 = vcmask 130048
      %v350 = vsel %vm348, %v283, 0
      %v353 = vsel %vm348, %v285, 0
      %v356 = vsel %vm348, %v287, 0
      %v359 = vsel %vm348, %v289, 0
      %361 = vmatprep.subr.bf16.mxu0 0
      %362 = vmatpush1.bf16.msra.mxu0 %v337
      %363 = vmatprep.subr.bf16.mxu0 0
      %364 = vmatpush1.bf16.msra.mxu0 %v336
      %365 = vmatprep.subr.bf16.mxu0 0
      %366 = vmatpush1.bf16.msra.mxu0 %v335
      %367 = vmatprep.subr.bf16.mxu0 0
      %368 = vmatpush1.bf16.msra.mxu0 %v334
      %369 = vmatprep.subr.bf16.mxu0 0
      %370 = vmatpush1.bf16.msra.mxu0 %v333
      %371 = vmatprep.subr.bf16.mxu0 0
      %372 = vmatpush1.bf16.msra.mxu0 %v332
      %373 = vmatprep.subr.bf16.mxu0 0
      %374 = vmatpush1.bf16.msra.mxu0 %v331
      %375 = vmatprep.subr.bf16.mxu0 0
      %376 = vmatpush1.bf16.msra.mxu0 %v330
      %377 = vmatprep.subr.bf16.mxu0 0
      %378 = vmatpush2.bf16.msra.mxu0 0
      %379 = vmatprep.subr.bf16.mxu0 0
      %380 = vmatpush2.bf16.msra.mxu0 0
      %381 = vmatprep.subr.bf16.mxu0 0
      %382 = vmatpush2.bf16.msra.mxu0 0
      %383 = vmatprep.subr.bf16.mxu0 0
      %384 = vmatpush2.bf16.msra.mxu0 0
      %385 = vmatprep.subr.bf16.mxu0 0
      %386 = vmatpush2.bf16.msra.mxu0 0
      %387 = vmatprep.subr.bf16.mxu0 0
      %388 = vmatpush2.bf16.msra.mxu0 0
      %389 = vmatprep.subr.bf16.mxu0 0
      %390 = vmatpush2.bf16.msra.mxu0 0
      %391 = vmatprep.subr.bf16.mxu0 0
      %392 = vmatpush2.bf16.msra.mxu0 %v338
      %393 = vmatprep.mubr.bf16.mxu0 %v350
      %394 = vmatmul.mubr.bf16.gmra.mxu0 %v282
      %v395 = vpop.f32.mrf.mxu0
      %v396 = vadd.f32 0.0, %v395
      %v397 = vpop.f32.mrf.mxu0
      %v398 = vpop.f32.mrf.mxu0
      %v399 = vadd.f32 0.0, %v398
      %v400 = vpop.f32.mrf.mxu0
      %401 = vmatprep.mubr.bf16.mxu0 %v353
      %402 = vmatmul.mubr.bf16.gmra.mxu0 %v284
      %v403 = vpop.f32.mrf.mxu0
      %v404 = vadd.f32 0.0, %v403
      %v405 = vpop.f32.mrf.mxu0
      %v406 = vpop.f32.mrf.mxu0
      %v407 = vadd.f32 0.0, %v406
      %v408 = vpop.f32.mrf.mxu0
      %409 = vmatprep.mubr.bf16.mxu0 %v356
      %410 = vmatmul.mubr.bf16.gmra.mxu0 %v286
      %v411 = vpop.f32.mrf.mxu0
      %v412 = vadd.f32 0.0, %v411
      %v413 = vpop.f32.mrf.mxu0
      %v414 = vpop.f32.mrf.mxu0
      %v415 = vadd.f32 0.0, %v414
      %v416 = vpop.f32.mrf.mxu0
      %417 = vmatprep.mubr.bf16.mxu0 %v359
      %418 = vmatmul.mubr.bf16.gmra.mxu0 %v288
      %v419 = vpop.f32.mrf.mxu0
      %v420 = vadd.f32 0.0, %v419
      %v421 = vpop.f32.mrf.mxu0
      %v422 = vpop.f32.mrf.mxu0
      %v423 = vadd.f32 0.0, %v422
      %v424 = vpop.f32.mrf.mxu0
      %425 = vdwg.mxu0
      %v426 = vld [vmem:[%s2] sm:$0x1]
      %v428 = vlaneseq
      %v429 = vshrl.u32 %v428, 7
      %v430 = vsub.s32 0, %v429
      %v431 = vrot.slane %v426, %v430
      %v433 = vmul.f32 %v396, %v431
      %v434 = vmul.f32 %v399, %v431
      %v435 = vmul.f32 %v404, %v431
      %v436 = vmul.f32 %v407, %v431
      %v437 = vmul.f32 %v412, %v431
      %v438 = vmul.f32 %v415, %v431
      %v439 = vmul.f32 %v420, %v431
      %v440 = vmul.f32 %v423, %v431
      %v441 = vld [vmem:[%s3] sm:$0x1]
      %v443 = vlaneseq
      %v444 = vshrl.u32 %v443, 7
      %v445 = vsub.s32 0, %v444
      %v446 = vrot.slane %v441, %v445
      %v448 = vadd.f32 %v433, %v446
      %v449 = vadd.f32 %v434, %v446
      %v450 = vadd.f32 %v435, %v446
      %v451 = vadd.f32 %v436, %v446
      %v452 = vadd.f32 %v437, %v446
      %v453 = vadd.f32 %v438, %v446
      %v454 = vadd.f32 %v439, %v446
      %v455 = vadd.f32 %v440, %v446
      %v456 = vld [vmem:[%s4] sm:$0x1]
      %vm457 = vcmp.gt.f32.partialorder %v456, 0.0
      %v458 = vmax.f32 %v448, 0.0
      %v459 = vmax.f32 %v449, 0.0
      %v460 = vmax.f32 %v450, 0.0
      %v461 = vmax.f32 %v451, 0.0
      %v462 = vmax.f32 %v452, 0.0
      %v463 = vmax.f32 %v453, 0.0
      %v464 = vmax.f32 %v454, 0.0
      %v465 = vmax.f32 %v455, 0.0
      %v466 = vsel %vm457, 1, 0
      %v467 = vlaneseq
      %v468 = vshrl.u32 %v467, 7
      %v469 = vsub.s32 0, %v468
      %v470 = vrot.slane %v466, %v469
      %vm471 = vcmp.eq.s32.totalorder %v470, 1
      %v472 = vsel %vm471, %v458, %v448
      %v473 = vsel %vm471, %v459, %v449
      %v474 = vsel %vm471, %v460, %v450
      %v475 = vsel %vm471, %v461, %v451
      %v476 = vsel %vm471, %v462, %v452
      %v477 = vsel %vm471, %v463, %v453
      %v478 = vsel %vm471, %v464, %v454
      %v479 = vsel %vm471, %v465, %v455
      %v480 = vpack.c.bf16 %v473, %v472
      %v481 = vpack.c.bf16 %v475, %v474
      %v482 = vpack.c.bf16 %v477, %v476
      %v483 = vpack.c.bf16 %v479, %v478
      %v488 = vunpack.c.l.b16 %v480
      %v489 = vunpack.c.h.b16 %v480
      %v490 = vunpack.c.l.b16 %v481
      %v491 = vunpack.c.h.b16 %v481
      %v492 = vunpack.c.l.b16 %v482
      %v493 = vunpack.c.h.b16 %v482
      %v494 = vunpack.c.l.b16 %v483
      %v495 = vunpack.c.h.b16 %v483
      %v496 = vpack.c.b16 %v488, %v488
      %v497 = vpack.c.b16 %v489, %v489
      %v498 = vpack.c.b16 %v490, %v490
      %v499 = vpack.c.b16 %v491, %v491
      %v500 = vpack.c.b16 %v492, %v492
      %v501 = vpack.c.b16 %v493, %v493
      %v502 = vpack.c.b16 %v494, %v494
      %v503 = vpack.c.b16 %v495, %v495
      %vm512 = vcmask 125952
      %513 = vst.msk [vmem:[%s229] sm:$0xf] %vm512, %v496
      %514 = vst.msk [vmem:[%s229 + $0x4] sm:$0xf] %vm512, %v497
      %515 = vst.msk [vmem:[%s229 + $0x8] sm:$0xf] %vm512, %v498
      %516 = vst.msk [vmem:[%s229 + $0xc] sm:$0xf] %vm512, %v499
      %517 = vst.msk [vmem:[%s229 + $0x10] sm:$0xf] %vm512, %v500
      %518 = vst.msk [vmem:[%s229 + $0x14] sm:$0xf] %vm512, %v501
      %519 = vst.msk [vmem:[%s229 + $0x18] sm:$0xf] %vm512, %v502
      %520 = vst.msk [vmem:[%s229 + $0x1c] sm:$0xf] %vm512, %v503
      %s521 = smul.u32 8, %s16
      %p522 = scmp.lt.s32.totalorder %s521, 15
      %s523 = scalar_select %p522, %s521, 15
      %s524 = smul.addr %s523, 4
      %s525 = scalar_lea.vmem %s5, %s524
      // Predicated region
      $region41: #{network_block_forward.8} parent=39 // pred_check
        %p526 = pneg %p144
      $region42: #{network_block_forward.8} parent=39 // pred_check_branch
        %528 = sbr.rel (%p526) target = $region44
      $region43: #{network_block_forward.8} parent=39 // pred_region
        %s529 = smul.u32 8, %s16
      $region44: #{network_block_forward.8} parent=39 // pred_fallthru
        _
    $region40: #{network_block_forward.8} parent=5 // pred_fallthru
      _
    %p530 = scmp.le.s32.totalorder 2, %s11
    // Predicated region
    $region45: #{network_block_forward.8} parent=5 // pred_check
      %p531 = pneg %p530
    $region46: #{network_block_forward.8} parent=5 // pred_check_branch
      %533 = sbr.rel (%p531) target = $region48
    $region47: #{network_block_forward.8} parent=5 // pred_region
      %s534 = ssub.s32 %s11, 2
      // Predicated region
      $region49: #{network_block_forward.8} parent=47 // pred_check
        %p535 = pneg %p150
      $region50: #{network_block_forward.8} parent=47 // pred_check_branch
        %537 = sbr.rel (%p535) target = $region52
      $region51: #{network_block_forward.8} parent=47 // pred_region
        %s538 = smul.u32 8, %s17
        %p539 = scmp.lt.s32.totalorder %s538, 15
        %s540 = scalar_select %p539, %s538, 15
        %s541 = smul.addr %s540, 4
        %s542 = scalar_lea.vmem %s5, %s541
      $region52: #{network_block_forward.8} parent=47 // pred_fallthru
        _
    $region48: #{network_block_forward.8} parent=5 // pred_fallthru
      _
  $region6: #{network_block_forward.8} parent=0 // loop_footer
    %s15 = sadd.s32 1, %s11
  $region7: #{network_block_forward.8} parent=0 // loop_footer_branch
    %10 = sbr.rel target = $region3
  $region8: #{network_block_forward.8} parent=0 // loop_exit
    _

// kernel: network_block_forward.9
$region0: #{network_block_forward.9}
  #allocation0 [shape = 'u32[]', space=smem, size = 0x4, offset = 0x4, fixed_abs, tag = 'smem constant byte address 0x4 - core index']
  #allocation1 [shape = 'u32[144,128]{1,0:T(1,128)}', space=vmem, size = 0x12000, scoped, tag = 'internal scratch']
  %s0 = inlined_call_operand.vmem [shape: bf16[128,144], index: 0, kind: input, shape index: {}]
  %s1 = inlined_call_operand.vmem [shape: bf16[144,16], index: 1, kind: input, shape index: {}]
  %s2 = inlined_call_operand.vmem [shape: f32[128,16], index: 2, kind: input, shape index: {}]
  %s3 = inlined_call_operand.hbm [shape: f32[128,16], index: 3, kind: output, shape index: {}]
  %s4 = sld [smem:[#allocation0]]
  $region45: #{network_block_forward.9} parent=0
    _
  %s6 = ssub.s32 1, %s4
  %s7 = scalar_select 0, %s6, %s4
  $region1: #{network_block_forward.9} parent=0
    #allocation2 [shape = 'u8[65536]{0}', space=vmem, size = 0x10000, scoped, tag = 'output window, operand 0']
    #allocation3 [shape = 's32[2]{0}', space=sflag, size = 0x8, scoped, tag = 'scoped memory for network_block_forward.9']
    %8 = vsyncpa [#allocation3], 0
    %s9 = scalar_lea.sflag [#allocation3], 1
    %10 = vsyncpa %s9, 0
    loop: start=0, step=1, limit=4
    $region2: #{network_block_forward.9} parent=1 // loop_pre_header
      _
    $region3: #{network_block_forward.9} parent=1 // loop_header
      %s12 = sphi 0, %s16
      %p13 = scmp.ge.s32.totalorder %s12, 4
      %s22 = sphi 0, %s24
      %s25 = sphi 0, %s22
      %s26 = sphi 0, %s25
      %s42 = sphi 0, %s26
      %s46 = sphi 0, %s46
      %s48 = sphi 0, %s46
      %s49 = sphi 0, %s48
      %s63 = sphi 0, %s49
      %s69 = sphi 0, %s71
      %s72 = sphi 0, %s69
      %s73 = sphi 0, %s72
      %s89 = sphi 0, %s73
      %s95 = sphi 0, %s97
      %s98 = sphi 0, %s95
      %s99 = sphi 0, %s98
      %s115 = sphi 0, %s99
    $region4: #{network_block_forward.9} parent=1 // loop_header_branch
      %15 = sbr.rel (%p13) target = $region8
    $region5: #{network_block_forward.9} parent=1 // loop_body
      %s17 = ssub.s32 %s12, 1
      %s18 = ssub.s32 %s12, 2
      %s19 = sadd.s32 %s12, 1
      %s20 = ssub.s32 %s12, %s19
      %p21 = scmp.eq.s32.totalorder %s20, 0
      %s23 = sadd.s32 %s22, 1
      %s24 = scalar_select %p21, %s22, %s23
      %p27 = pneg %p21
      %p28 = scmp.eq.s32.totalorder %s12, 1
      %p29 = por %p27, %p28
      %p30 = scmp.ne.s32.totalorder %s22, %s25
      %p31 = scmp.eq.s32.totalorder %s12, 0
      %p32 = por %p30, %p31
      %p33 = scmp.ne.s32.totalorder %s22, %s25
      %p34 = scmp.eq.s32.totalorder %s17, 1
      %p35 = por %p33, %p34
      %p36 = scmp.ne.s32.totalorder %s25, %s26
      %p37 = scmp.eq.s32.totalorder %s17, 0
      %p38 = por %p36, %p37
      %p39 = scmp.ne.s32.totalorder %s25, %s26
      %p40 = scmp.eq.s32.totalorder %s18, 1
      %p41 = por %p39, %p40
      %p43 = scmp.ne.s32.totalorder %s26, %s42
      %p44 = scmp.eq.s32.totalorder %s18, 0
      %p45 = por %p43, %p44
      %s47 = sadd.s32 %s46, 1
      %p50 = scmp.eq.s32.totalorder %s12, 1
      %p51 = scmp.ne.s32.totalorder %s46, %s48
      %p52 = scmp.eq.s32.totalorder %s12, 0
      %p53 = por %p51, %p52
      %p54 = scmp.ne.s32.totalorder %s46, %s48
      %p55 = scmp.eq.s32.totalorder %s17, 1
      %p56 = por %p54, %p55
      %p57 = scmp.ne.s32.totalorder %s48, %s49
      %p58 = scmp.eq.s32.totalorder %s17, 0
      %p59 = por %p57, %p58
      %p60 = scmp.ne.s32.totalorder %s48, %s49
      %p61 = scmp.eq.s32.totalorder %s18, 1
      %p62 = por %p60, %p61
      %p64 = scmp.ne.s32.totalorder %s49, %s63
      %p65 = scmp.eq.s32.totalorder %s18, 0
      %p66 = por %p64, %p65
      %s67 = ssub.s32 %s12, %s19
      %p68 = scmp.eq.s32.totalorder %s67, 0
      %s70 = sadd.s32 %s69, 1
      %s71 = scalar_select %p68, %s69, %s70
      %p74 = pneg %p68
      %p75 = scmp.eq.s32.totalorder %s12, 1
      %p76 = por %p74, %p75
      %p77 = scmp.ne.s32.totalorder %s69, %s72
      %p78 = scmp.eq.s32.totalorder %s12, 0
      %p79 = por %p77, %p78
      %p80 = scmp.ne.s32.totalorder %s69, %s72
      %p81 = scmp.eq.s32.totalorder %s17, 1
      %p82 = por %p80, %p81
      %p83 = scmp.ne.s32.totalorder %s72, %s73
      %p84 = scmp.eq.s32.totalorder %s17, 0
      %p85 = por %p83, %p84
      %p86 = scmp.ne.s32.totalorder %s72, %s73
      %p87 = scmp.eq.s32.totalorder %s18, 1
      %p88 = por %p86, %p87
      %p90 = scmp.ne.s32.totalorder %s73, %s89
      %p91 = scmp.eq.s32.totalorder %s18, 0
      %p92 = por %p90, %p91
      %s93 = ssub.s32 %s12, %s19
      %p94 = scmp.eq.s32.totalorder %s93, 0
      %s96 = sadd.s32 %s95, 1
      %s97 = scalar_select %p94, %s95, %s96
      %p100 = pneg %p94
      %p101 = scmp.eq.s32.totalorder %s12, 1
      %p102 = por %p100, %p101
      %p103 = scmp.ne.s32.totalorder %s95, %s98
      %p104 = scmp.eq.s32.totalorder %s12, 0
      %p105 = por %p103, %p104
      %p106 = scmp.ne.s32.totalorder %s95, %s98
      %p107 = scmp.eq.s32.totalorder %s17, 1
      %p108 = por %p106, %p107
      %p109 = scmp.ne.s32.totalorder %s98, %s99
      %p110 = scmp.eq.s32.totalorder %s17, 0
      %p111 = por %p109, %p110
      %p112 = scmp.ne.s32.totalorder %s98, %s99
      %p113 = scmp.eq.s32.totalorder %s18, 1
      %p114 = por %p112, %p113
      %p116 = scmp.ne.s32.totalorder %s99, %s115
      %p117 = scmp.eq.s32.totalorder %s18, 0
      %p118 = por %p116, %p117
      %p119 = scmp.le.s32.totalorder 1, %s12
      %p120 = scmp.lt.s32.totalorder %s12, 3
      %p121 = pnand %p119, %p120
      %p122 = pneg %p121
      // Predicated region
      $region9: #{network_block_forward.9} parent=5 // pred_check
        _
      $region10: #{network_block_forward.9} parent=5 // pred_check_branch
        %124 = sbr.rel (%p121) target = $region12
      $region11: #{network_block_forward.9} parent=5 // pred_region
        %s125 = ssub.s32 %s12, 1
        // Predicated region
        $region13: #{network_block_forward.9} parent=11 // pred_check
          %p126 = pneg %p59
        $region14: #{network_block_forward.9} parent=11 // pred_check_branch
          %128 = sbr.rel (%p126) target = $region16
        $region15: #{network_block_forward.9} parent=11 // pred_region
          _
        $region16: #{network_block_forward.9} parent=11 // pred_fallthru
          _
      $region12: #{network_block_forward.9} parent=5 // pred_fallthru
        _
      %p129 = scmp.lt.s32.totalorder %s12, 2
      // Predicated region
      $region17: #{network_block_forward.9} parent=5 // pred_check
        %p130 = pneg %p129
      $region18: #{network_block_forward.9} parent=5 // pred_check_branch
        %132 = sbr.rel (%p130) target = $region20
      $region19: #{network_block_forward.9} parent=5 // pred_region
        // Predicated region
        $region21: #{network_block_forward.9} parent=19 // pred_check
          %p133 = pneg %p32
        $region22: #{network_block_forward.9} parent=19 // pred_check_branch
          %135 = sbr.rel (%p133) target = $region24
        $region23: #{network_block_forward.9} parent=19 // pred_region
          %s136 = smul.u32 8, %s12
          %p137 = scmp.lt.s32.totalorder %s136, 15
          %s138 = scalar_select %p137, %s136, 15
          %s139 = smul.addr %s138, 2
          %s140 = smul.addr %s139, 4
          %s141 = scalar_lea.vmem %s0, %s140
          %s142 = smul.u32 8, %s12
        $region24: #{network_block_forward.9} parent=19 // pred_fallthru
          _
        // Predicated region
        $region25: #{network_block_forward.9} parent=19 // pred_check
          %p143 = pneg %p79
        $region26: #{network_block_forward.9} parent=19 // pred_check_branch
          %145 = sbr.rel (%p143) target = $region28
        $region27: #{network_block_forward.9} parent=19 // pred_region
          %s146 = smul.u32 8, %s12
          %p147 = scmp.lt.s32.totalorder %s146, 15
          %s148 = scalar_select %p147, %s146, 15
          %s149 = smul.addr %s148, 8
          %s150 = scalar_lea.vmem %s2, %s149
          %s151 = smul.u32 8, %s12
        $region28: #{network_block_forward.9} parent=19 // pred_fallthru
          _
      $region20: #{network_block_forward.9} parent=5 // pred_fallthru
        _
      %p152 = scmp.le.s32.totalorder 1, %s12
      %p153 = scmp.lt.s32.totalorder %s12, 3
      %p154 = pnand %p152, %p153
      %p155 = pneg %p154
      // Predicated region
      $region29: #{network_block_forward.9} parent=5 // pred_check
        _
      $region30: #{network_block_forward.9} parent=5 // pred_check_branch
        %157 = sbr.rel (%p154) target = $region32
      $region31: #{network_block_forward.9} parent=5 // pred_region
        %s158 = ssub.s32 %s12, 1
        %s159 = smul.u32 8, %s17
        %p160 = scmp.lt.s32.totalorder %s159, 15
        %s161 = scalar_select %p160, %s159, 15
        %s162 = smul.addr %s161, 2
        %s163 = smul.addr %s162, 4
        %s164 = scalar_lea.vmem %s0, %s163
        %p165 = pneg %p38
        %p166 = pneg %p35
        %p167 = pneg %p59
        %p168 = pneg %p56
        %s169 = smul.u32 8, %s17
        %p170 = scmp.lt.s32.totalorder %s169, 15
        %s171 = scalar_select %p170, %s169, 15
        %s172 = smul.addr %s171, 8
        %s173 = scalar_lea.vmem %s2, %s172
        %p174 = pneg %p85
        %p175 = pneg %p82
        %p176 = pneg %p111
        %p177 = pneg %p108
        %s178 = sand.u32 %s98, 1
        %s179 = scalar_lea.sflag [#allocation3], %s178
        %s180 = sand.u32 %s98, 1
        %s181 = smul.addr %s180, 64
        %s182 = scalar_lea.vmem [#allocation2], %s181
        %s183 = smul.u32 8, %s17
        %p184 = scmp.lt.s32.totalorder %s183, 15
        %s185 = scalar_select %p184, %s183, 15
        %s186 = smul.addr %s185, 2
        %s187 = smul.addr %s186, 4
        %s188 = scalar_lea.vmem %s0, %s187
        %s189 = smul.u32 8, %s17
        %s190 = smul.u32 8, %s17
        %p191 = scmp.lt.s32.totalorder %s190, 15
        %s192 = scalar_select %p191, %s190, 15
        %s193 = smul.addr %s192, 8
        %s194 = scalar_lea.vmem %s2, %s193
        %s195 = smul.u32 8, %s17
        %s196 = smul.u32 8, %s17
        %v198 = vld [vmem:[%s188] sm:$0xff]
        %v199 = vld [vmem:[%s188 + $0x8] sm:$0xff]
        %v200 = vld [vmem:[%s188 + $0x10] sm:$0xff]
        %v201 = vld [vmem:[%s188 + $0x18] sm:$0xff]
        %v202 = vld [vmem:[%s188 + $0x20] sm:$0xff]
        %v203 = vld [vmem:[%s188 + $0x28] sm:$0xff]
        %v204 = vld [vmem:[%s188 + $0x30] sm:$0xff]
        %v205 = vld [vmem:[%s188 + $0x38] sm:$0xff]
        %v206 = vld [vmem:[%s1] sm:$0xf]
        %v207 = vld [vmem:[%s1 + $0x4] sm:$0xf]
        %v208 = vld [vmem:[%s1 + $0x8] sm:$0xf]
        %v209 = vld [vmem:[%s1 + $0xc] sm:$0xf]
        %v210 = vld [vmem:[%s1 + $0x10] sm:$0xf]
        %v211 = vld [vmem:[%s1 + $0x14] sm:$0xf]
        %v212 = vld [vmem:[%s1 + $0x18] sm:$0xf]
        %v213 = vld [vmem:[%s1 + $0x1c] sm:$0xf]
        %v214 = vld [vmem:[%s1 + $0x20] sm:$0xf]
        %v215 = vld [vmem:[%s1 + $0x24] sm:$0xf]
        %v216 = vld [vmem:[%s1 + $0x28] sm:$0xf]
        %v217 = vld [vmem:[%s1 + $0x2c] sm:$0xf]
        %v218 = vld [vmem:[%s1 + $0x30] sm:$0xf]
        %v219 = vld [vmem:[%s1 + $0x34] sm:$0xf]
        %v220 = vld [vmem:[%s1 + $0x38] sm:$0xf]
        %v221 = vld [vmem:[%s1 + $0x3c] sm:$0xf]
        %v222 = vld [vmem:[%s1 + $0x40] sm:$0xf]
        %v223 = vld [vmem:[%s1 + $0x44] sm:$0xf]
        %v224 = vld [vmem:[%s194] sm:$0xff]
        %v225 = vld [vmem:[%s194 + $0x8] sm:$0xff]
        %v226 = vld [vmem:[%s194 + $0x10] sm:$0xff]
        %v227 = vld [vmem:[%s194 + $0x18] sm:$0xff]
        %v228 = vld [vmem:[%s194 + $0x20] sm:$0xff]
        %v229 = vld [vmem:[%s194 + $0x28] sm:$0xff]
        %v230 = vld [vmem:[%s194 + $0x30] sm:$0xff]
        %v231 = vld [vmem:[%s194 + $0x38] sm:$0xff]
        %v240 = vunpack.c.l.b16 %v198
        %v241 = vunpack.c.h.b16 %v198
        %v242 = vunpack.c.l.b16 %v199
        %v243 = vunpack.c.h.b16 %v199
        %v244 = vunpack.c.l.b16 %v200
        %v245 = vunpack.c.h.b16 %v200
        %v246 = vunpack.c.l.b16 %v201
        %v247 = vunpack.c.h.b16 %v201
        %v248 = vunpack.c.l.b16 %v202
        %v249 = vunpack.c.h.b16 %v202
        %v250 = vunpack.c.l.b16 %v203
        %v251 = vunpack.c.h.b16 %v203
        %v252 = vunpack.c.l.b16 %v204
        %v253 = vunpack.c.h.b16 %v204
        %v254 = vunpack.c.l.b16 %v205
        %v255 = vunpack.c.h.b16 %v205
        %v256 = vpack.c.b16 %v242, %v240
        %v257 = vpack.c.b16 %v243, %v241
        %v258 = vpack.c.b16 %v246, %v244
        %v259 = vpack.c.b16 %v247, %v245
        %v260 = vpack.c.b16 %v250, %v248
        %v261 = vpack.c.b16 %v251, %v249
        %v262 = vpack.c.b16 %v254, %v252
        %v263 = vpack.c.b16 %v255, %v253
        %v286 = vunpack.c.l.b16 %v206
        %v287 = vunpack.c.l.b16 %v207
        %v288 = vunpack.c.l.b16 %v208
        %v289 = vunpack.c.l.b16 %v209
        %v290 = vunpack.c.l.b16 %v210
        %v291 = vunpack.c.l.b16 %v211
        %v292 = vunpack.c.l.b16 %v212
        %v293 = vunpack.c.l.b16 %v213
        %v294 = vunpack.c.l.b16 %v214
        %v295 = vunpack.c.l.b16 %v215
        %v296 = vunpack.c.l.b16 %v216
        %v297 = vunpack.c.l.b16 %v217
        %v298 = vunpack.c.l.b16 %v218
        %v299 = vunpack.c.l.b16 %v219
        %v300 = vunpack.c.l.b16 %v220
        %v301 = vunpack.c.l.b16 %v221
        %v302 = vunpack.c.l.b16 %v222
        %v303 = vunpack.c.l.b16 %v223
        %v304 = vpack.c.b16 %v287, %v286
        %v305 = vpack.c.b16 %v289, %v288
        %v306 = vpack.c.b16 %v291, %v290
        %v307 = vpack.c.b16 %v293, %v292
        %v308 = vpack.c.b16 %v295, %v294
        %v309 = vpack.c.b16 %v297, %v296
        %v310 = vpack.c.b16 %v299, %v298
        %v311 = vpack.c.b16 %v301, %v300
        %v312 = vpack.c.b16 %v303, %v302
        %vm322 = vcmask 130048
        %v324 = vsel %vm322, %v257, 0
        %v327 = vsel %vm322, %v259, 0
        %v330 = vsel %vm322, %v261, 0
        %v333 = vsel %vm322, %v263, 0
        %335 = vmatprep.subr.bf16.mxu0 0
        %336 = vmatpush1.bf16.msra.mxu0 %v311
        %337 = vmatprep.subr.bf16.mxu0 0
        %338 = vmatpush1.bf16.msra.mxu0 %v310
        %339 = vmatprep.subr.bf16.mxu0 0
        %340 = vmatpush1.bf16.msra.mxu0 %v309
        %341 = vmatprep.subr.bf16.mxu0 0
        %342 = vmatpush1.bf16.msra.mxu0 %v308
        %343 = vmatprep.subr.bf16.mxu0 0
        %344 = vmatpush1.bf16.msra.mxu0 %v307
        %345 = vmatprep.subr.bf16.mxu0 0
        %346 = vmatpush1.bf16.msra.mxu0 %v306
        %347 = vmatprep.subr.bf16.mxu0 0
        %348 = vmatpush1.bf16.msra.mxu0 %v305
        %349 = vmatprep.subr.bf16.mxu0 0
        %350 = vmatpush1.bf16.msra.mxu0 %v304
        %351 = vmatprep.subr.bf16.mxu0 0
        %352 = vmatpush2.bf16.msra.mxu0 0
        %353 = vmatprep.subr.bf16.mxu0 0
        %354 = vmatpush2.bf16.msra.mxu0 0
        %355 = vmatprep.subr.bf16.mxu0 0
        %356 = vmatpush2.bf16.msra.mxu0 0
        %357 = vmatprep.subr.bf16.mxu0 0
        %358 = vmatpush2.bf16.msra.mxu0 0
        %359 = vmatprep.subr.bf16.mxu0 0
        %360 = vmatpush2.bf16.msra.mxu0 0
        %361 = vmatprep.subr.bf16.mxu0 0
        %362 = vmatpush2.bf16.msra.mxu0 0
        %363 = vmatprep.subr.bf16.mxu0 0
        %364 = vmatpush2.bf16.msra.mxu0 0
        %365 = vmatprep.subr.bf16.mxu0 0
        %366 = vmatpush2.bf16.msra.mxu0 %v312
        %367 = vmatprep.mubr.bf16.mxu0 %v324
        %368 = vmatmul.mubr.bf16.gmra.mxu0 %v256
        %v369 = vpop.f32.mrf.mxu0
        %v370 = vadd.f32 %v224, %v369
        %v371 = vpop.f32.mrf.mxu0
        %v372 = vpop.f32.mrf.mxu0
        %v373 = vadd.f32 %v225, %v372
        %v374 = vpop.f32.mrf.mxu0
        %375 = vmatprep.mubr.bf16.mxu0 %v327
        %376 = vmatmul.mubr.bf16.gmra.mxu0 %v258
        %v377 = vpop.f32.mrf.mxu0
        %v378 = vadd.f32 %v226, %v377
        %v379 = vpop.f32.mrf.mxu0
        %v380 = vpop.f32.mrf.mxu0
        %v381 = vadd.f32 %v227, %v380
        %v382 = vpop.f32.mrf.mxu0
        %383 = vmatprep.mubr.bf16.mxu0 %v330
        %384 = vmatmul.mubr.bf16.gmra.mxu0 %v260
        %v385 = vpop.f32.mrf.mxu0
        %v386 = vadd.f32 %v228, %v385
        %v387 = vpop.f32.mrf.mxu0
        %v388 = vpop.f32.mrf.mxu0
        %v389 = vadd.f32 %v229, %v388
        %v390 = vpop.f32.mrf.mxu0
        %391 = vmatprep.mubr.bf16.mxu0 %v333
        %392 = vmatmul.mubr.bf16.gmra.mxu0 %v262
        %v393 = vpop.f32.mrf.mxu0
        %v394 = vadd.f32 %v230, %v393
        %v395 = vpop.f32.mrf.mxu0
        %v396 = vpop.f32.mrf.mxu0
        %v397 = vadd.f32 %v231, %v396
        %v398 = vpop.f32.mrf.mxu0
        %399 = vdwg.mxu0
        %400 = vst.msk [vmem:[%s182] sm:$0xff] %vm322, %v370
        %401 = vst.msk [vmem:[%s182 + $0x8] sm:$0xff] %vm322, %v373
        %402 = vst.msk [vmem:[%s182 + $0x10] sm:$0xff] %vm322, %v378
        %403 = vst.msk [vmem:[%s182 + $0x18] sm:$0xff] %vm322, %v381
        %404 = vst.msk [vmem:[%s182 + $0x20] sm:$0xff] %vm322, %v386
        %405 = vst.msk [vmem:[%s182 + $0x28] sm:$0xff] %vm322, %v389
        %406 = vst.msk [vmem:[%s182 + $0x30] sm:$0xff] %vm322, %v394
        %407 = vst.msk [vmem:[%s182 + $0x38] sm:$0xff] %vm322, %v397
        %s408 = sand.u32 %s98, 1
        %s409 = scalar_lea.sflag [#allocation3], %s408
        %s410 = sand.u32 %s98, 1
        %s411 = smul.addr %s410, 64
        %s412 = scalar_lea.vmem [#allocation2], %s411
        // Predicated region
        $region33: #{network_block_forward.9} parent=31 // pred_check
          %p413 = pneg %p108
        $region34: #{network_block_forward.9} parent=31 // pred_check_branch
          %415 = sbr.rel (%p413) target = $region36
        $region35: #{network_block_forward.9} parent=31 // pred_region
          %s416 = smul.u32 8, %s17
          %s418 = ssub.s32 1024, 1024
          %419 = vsyncadd %s409, %s418
          %s420 = smul.addr %s416, 128
          %s421 = scalar_lea.hbm %s3, %s420
          %s422 = sshll.u32 %s412, 4
          %s423 = int_to_ptr.vmem [resolvable:$true] %s422
          %428 = dma.vmem_to_hbm [thread:$0]  %s423, 1024, %s421, %s409, 128, 128, 8
        $region36: #{network_block_forward.9} parent=31 // pred_fallthru
          _
      $region32: #{network_block_forward.9} parent=5 // pred_fallthru
        _
      %p429 = scmp.le.s32.totalorder 2, %s12
      // Predicated region
      $region37: #{network_block_forward.9} parent=5 // pred_check
        %p430 = pneg %p429
      $region38: #{network_block_forward.9} parent=5 // pred_check_branch
        %432 = sbr.rel (%p430) target = $region40
      $region39: #{network_block_forward.9} parent=5 // pred_region
        %s433 = ssub.s32 %s12, 2
        // Predicated region
        $region41: #{network_block_forward.9} parent=39 // pred_check
          %p434 = pneg %p114
        $region42: #{network_block_forward.9} parent=39 // pred_check_branch
          %436 = sbr.rel (%p434) target = $region44
        $region43: #{network_block_forward.9} parent=39 // pred_region
          %s437 = sand.u32 %s99, 1
          %s438 = scalar_lea.sflag [#allocation3], %s437
          %s439 = sand.u32 %s99, 1
          %s440 = smul.addr %s439, 64
          %s441 = scalar_lea.vmem [#allocation2], %s440
          %442 = dma.done %s438, 1024
        $region44: #{network_block_forward.9} parent=39 // pred_fallthru
          _
      $region40: #{network_block_forward.9} parent=5 // pred_fallthru
        _
    $region6: #{network_block_forward.9} parent=1 // loop_footer
      %s16 = sadd.s32 1, %s12
    $region7: #{network_block_forward.9} parent=1 // loop_footer_branch
      %11 = sbr.rel target = $region3
    $region8: #{network_block_forward.9} parent=1 // loop_exit
      _
    %443 = vsyncpa [#allocation3], 1
    %s444 = scalar_lea.sflag [#allocation3], 1
    %445 = vsyncpa %s444, 1

</llo_original>
